<compile_context>
chip_gen: v5e
topology: v5e:2x2
jax: 0.10.0
libtpu: 0.0.40
codegen_flags: <defaults>
</compile_context>

<pallas_src>
import functools

import jax
import jax.numpy as jnp
from jax import lax
from jax.experimental import pallas as pl
from jax.experimental.pallas import tpu as pltpu

_SQRT_HALF = 0.7071067811865476
_VMEM_LIMIT = 64 * 1024 * 1024


# ---------------------------------------------------------------------------
# small helpers
# ---------------------------------------------------------------------------
def _erf_approx(x):
    # Abramowitz & Stegun 7.1.26 (max abs err ~1.5e-7) -> matches torch's exact
    # erf-GELU far below matmul precision, uses only exp/elementwise ops.
    a1, a2, a3, a4, a5 = (0.254829592, -0.284496736, 1.421413741,
                          -1.453152027, 1.061405429)
    p = 0.3275911
    ax = jnp.abs(x)
    t = 1.0 / (1.0 + p * ax)
    poly = ((((a5 * t + a4) * t + a3) * t + a2) * t + a1) * t
    y = 1.0 - poly * jnp.exp(-ax * ax)
    return jnp.where(x >= 0, y, -y)


def _gelu_exact(x):
    return 0.5 * x * (1.0 + _erf_approx(x * _SQRT_HALF))


def _round_up(x, m):
    return ((x + m - 1) // m) * m


def _tile_and_pad(dim, preferred):
    """Tile size and padded extent. Never falls back to a huge full-extent tile."""
    if dim <= preferred:
        return dim, dim                      # full-extent block (allowed by rule)
    return preferred, _round_up(dim, preferred)


# ---------------------------------------------------------------------------
# Linear kernel: y = [LN](x) @ W^T + b  (+ fused GELU and/or residual add)
# ---------------------------------------------------------------------------
def _linear_kernel(*refs, fuse_ln, fuse_gelu, add_residual, eps):
    idx = 0
    x_ref = refs[idx]; idx += 1
    w_ref = refs[idx]; idx += 1
    b_ref = refs[idx]; idx += 1
    if fuse_ln:
        g_ref = refs[idx]; idx += 1
        beta_ref = refs[idx]; idx += 1
    if add_residual:
        res_ref = refs[idx]; idx += 1
    o_ref = refs[idx]; idx += 1
    acc_ref = refs[idx]

    k = pl.program_id(2)

    @pl.when(k == 0)
    def _():
        acc_ref[...] = jnp.zeros_like(acc_ref)

    if fuse_ln:
        # Single K step (tk == C): LayerNorm the whole row in f32, then feed
        # bf16 to the MXU.  Saves one full HBM write+read of the activations.
        xf = x_ref[...].astype(jnp.float32)
        mu = jnp.mean(xf, axis=-1, keepdims=True)
        xc = xf - mu
        var = jnp.mean(xc * xc, axis=-1, keepdims=True)
        xf = xc * lax.rsqrt(var + eps)
        xf = xf * g_ref[...].astype(jnp.float32) + beta_ref[...].astype(jnp.float32)
        x_mxu = xf.astype(jnp.bfloat16)
    else:
        x_mxu = x_ref[...].astype(jnp.bfloat16)
    w_mxu = w_ref[...].astype(jnp.bfloat16)

    # NT-form: contract the last (lane) dim of x (tm, tk) against the last dim
    # of the PyTorch-layout weight (tn, tk) -> (tm, tn); f32 accumulation.
    acc_ref[...] += lax.dot_general(
        x_mxu, w_mxu,
        dimension_numbers=(((1,), (1,)), ((), ())),
        preferred_element_type=jnp.float32)

    @pl.when(k == pl.num_programs(2) - 1)
    def _():
        y = acc_ref[...] + b_ref[...].astype(jnp.float32)
        if fuse_gelu:
            y = _gelu_exact(y)
        if add_residual:
            y = y + res_ref[...].astype(jnp.float32)
        o_ref[...] = y.astype(o_ref.dtype)


def linear(x, w, b, *, ln=None, fuse_gelu=False, residual=None,
           row_tile=512, col_tile=512, k_tile=512, eps=1e-5):
    m, kdim = x.shape
    n, kw = w.shape
    assert kw == kdim
    fuse_ln = ln is not None

    tm, mp = _tile_and_pad(m, row_tile)
    tn, np_ = _tile_and_pad(n, col_tile)
    if fuse_ln:
        tk, kp = kdim, kdim          # whole row needed for LN statistics
    else:
        tk, kp = _tile_and_pad(kdim, k_tile)

    # Zero-pad to tile multiples (exact for matmul; no-op for aligned shapes).
    if (mp, kp) != (m, kdim):
        x = jnp.pad(x, ((0, mp - m), (0, kp - kdim)))
    if (np_, kp) != (n, kdim):
        w = jnp.pad(w, ((0, np_ - n), (0, kp - kdim)))
    b2 = b.reshape(1, n)
    if np_ != n:
        b2 = jnp.pad(b2, ((0, 0), (0, np_ - n)))
    if residual is not None and residual.shape != (mp, np_):
        residual = jnp.pad(residual, ((0, mp - m), (0, np_ - n)))

    grid = (mp // tm, np_ // tn, kp // tk)

    in_specs = [
        pl.BlockSpec((tm, tk), lambda i, j, k: (i, k)),
        pl.BlockSpec((tn, tk), lambda i, j, k: (j, k)),
        pl.BlockSpec((1, tn), lambda i, j, k: (0, j)),
    ]
    args = [x, w, b2]
    if fuse_ln:
        in_specs += [pl.BlockSpec((1, kdim), lambda i, j, k: (0, 0)),
                     pl.BlockSpec((1, kdim), lambda i, j, k: (0, 0))]
        args += [ln[0].reshape(1, kdim), ln[1].reshape(1, kdim)]
    if residual is not None:
        in_specs.append(pl.BlockSpec((tm, tn), lambda i, j, k: (i, j)))
        args.append(residual)

    itemsize = x.dtype.itemsize
    bytes_accessed = (m * kdim + n * kdim + n + m * n
                      + (m * n if residual is not None else 0)) * itemsize
    cost = pl.CostEstimate(flops=2 * m * n * kdim,
                           transcendentals=(m * n if fuse_gelu else 0),
                           bytes_accessed=bytes_accessed)

    kernel = functools.partial(_linear_kernel, fuse_ln=fuse_ln,
                               fuse_gelu=fuse_gelu,
                               add_residual=residual is not None, eps=eps)
    out = pl.pallas_call(
        kernel,
        out_shape=jax.ShapeDtypeStruct((mp, np_), x.dtype),
        grid=grid,
        in_specs=in_specs,
        out_specs=pl.BlockSpec((tm, tn), lambda i, j, k: (i, j)),
        scratch_shapes=[pltpu.VMEM((tm, tn), jnp.float32)],
        compiler_params=pltpu.CompilerParams(
            dimension_semantics=("parallel", "parallel", "arbitrary"),
            vmem_limit_bytes=_VMEM_LIMIT),
        cost_estimate=cost,
    )(*args)
    if (mp, np_) != (m, n):
        out = out[:m, :n]
    return out


# ---------------------------------------------------------------------------
# Multi-head attention core.
# One batch element per grid step; the (L, 3C) qkv row-block is read directly
# (no XLA split/reshape/transpose), heads are processed in a static in-kernel
# loop, and the output is written as one lane-dense (L, C) block already in the
# (b*L + l, h*dh + d) layout consumed by out_proj.
# ---------------------------------------------------------------------------
def _attention_kernel(x_ref, o_ref, *, heads, dh, scale):
    c = heads * dh
    x = x_ref[0]                                   # (L, 3C)
    outs = []
    for h in range(heads):
        q = (x[:, h * dh:(h + 1) * dh].astype(jnp.float32) * scale
             ).astype(jnp.bfloat16)                                   # (L, dh)
        k = x[:, c + h * dh: c + (h + 1) * dh].astype(jnp.bfloat16)   # (L, dh)
        v = x[:, 2 * c + h * dh: 2 * c + (h + 1) * dh].astype(jnp.bfloat16)
        s = lax.dot_general(q, k,
                            dimension_numbers=(((1,), (1,)), ((), ())),
                            preferred_element_type=jnp.float32)       # (L, L)
        m = jnp.max(s, axis=-1, keepdims=True)
        e = jnp.exp(s - m)
        denom = jnp.sum(e, axis=-1, keepdims=True)
        o = lax.dot_general(e.astype(jnp.bfloat16), v,
                            dimension_numbers=(((1,), (0,)), ((), ())),
                            preferred_element_type=jnp.float32)       # (L, dh)
        # Normalize after the PV matmul: L reciprocals on the EUP instead of
        # L^2 divides on the VALU.
        outs.append(o * pl.reciprocal(denom, approx=True))
    o_ref[0] = jnp.concatenate(outs, axis=-1).astype(o_ref.dtype)


def attention(qkv, *, batch, seq, heads, dh, out_dtype):
    c = heads * dh
    scale = dh ** -0.5
    x3 = qkv.reshape(batch, seq, 3 * c)            # free reshape (row-major)
    cost = pl.CostEstimate(
        flops=4 * batch * heads * seq * seq * dh,
        transcendentals=batch * heads * seq * seq,
        bytes_accessed=(batch * seq * 3 * c + batch * seq * c)
        * qkv.dtype.itemsize)
    out = pl.pallas_call(
        functools.partial(_attention_kernel, heads=heads, dh=dh, scale=scale),
        out_shape=jax.ShapeDtypeStruct((batch, seq, c), out_dtype),
        grid=(batch,),
        in_specs=[pl.BlockSpec((1, seq, 3 * c), lambda b: (b, 0, 0))],
        out_specs=pl.BlockSpec((1, seq, c), lambda b: (b, 0, 0)),
        compiler_params=pltpu.CompilerParams(
            dimension_semantics=("parallel",),
            vmem_limit_bytes=_VMEM_LIMIT),
        cost_estimate=cost,
    )(x3)
    return out.reshape(batch * seq, c)             # free reshape


# ---------------------------------------------------------------------------
# CustomResidualAttentionBlock / CustomTransformer forward
# ---------------------------------------------------------------------------
def residual_attention_block(x2d, p, *, batch, seq, heads):
    c = x2d.shape[-1]
    dh = c // heads

    # ln_1 fused into the QKV projection.
    qkv = linear(x2d, p["w_qkv"], p["b_qkv"], ln=(p["ln1_w"], p["ln1_b"]))
    o = attention(qkv, batch=batch, seq=seq, heads=heads, dh=dh,
                  out_dtype=x2d.dtype)
    x2d = linear(o, p["w_out"], p["b_out"], residual=x2d)          # attn resid
    # ln_2 fused into c_fc, GELU fused into its epilogue.
    m = linear(x2d, p["w_fc"], p["b_fc"], ln=(p["ln2_w"], p["ln2_b"]),
               fuse_gelu=True)
    x2d = linear(m, p["w_proj"], p["b_proj"], residual=x2d)        # mlp resid
    return x2d


def custom_transformer_forward(x, params, *, heads):
    # batch_first=True path (module default); dropout p=0 -> identity.
    b, l, c = x.shape
    x2d = x.reshape(b * l, c)
    for p in params:
        x2d = residual_attention_block(x2d, p, batch=b, seq=l, heads=heads)
    return x2d.reshape(b, l, c)


# ---------------------------------------------------------------------------
# Pure-JAX reference (mirrors the PyTorch forward, f32 throughout)
# ---------------------------------------------------------------------------
def custom_transformer_ref(x, params, *, heads):
    b, l, c = x.shape
    dh = c // heads
    scale = dh ** -0.5

    def ln(t, w, bb, eps=1e-5):
        mu = jnp.mean(t, -1, keepdims=True)
        tc = t - mu
        var = jnp.mean(tc * tc, -1, keepdims=True)
        return tc * lax.rsqrt(var + eps) * w + bb

    h = x
    for p in params:
        y = ln(h, p["ln1_w"], p["ln1_b"])
        qkv = y @ p["w_qkv"].T + p["b_qkv"]
        q, k, v = jnp.split(qkv, 3, axis=-1)

        def split_heads(t):
            return t.reshape(b, l, heads, dh).transpose(0, 2, 1, 3)

        q, k, v = split_heads(q), split_heads(k), split_heads(v)
        s = (q * scale) @ jnp.swapaxes(k, -1, -2)
        a = jax.nn.softmax(s, axis=-1)
        o = (a @ v).transpose(0, 2, 1, 3).reshape(b, l, c)
        h = h + o @ p["w_out"].T + p["b_out"]

        y2 = ln(h, p["ln2_w"], p["ln2_b"])
        mfeat = y2 @ p["w_fc"].T + p["b_fc"]
        mfeat = 0.5 * mfeat * (1.0 + lax.erf(mfeat * _SQRT_HALF))   # exact GELU
        h = h + mfeat @ p["w_proj"].T + p["b_proj"]
    return h


# ---------------------------------------------------------------------------
# Parameter construction (deterministic, PyTorch Linear layout: (out, in))
# ---------------------------------------------------------------------------
def init_params(key, *, width, layers, mlp_ratio=4.0):
    c = width
    mw = int(c * mlp_ratio)
    params = []
    for _ in range(layers):
        keys = jax.random.split(key, 9)
        key = keys[0]
        params.append({
            "ln1_w": jnp.ones((c,), jnp.float32),
            "ln1_b": jnp.zeros((c,), jnp.float32),
            "w_qkv": jax.random.normal(keys[1], (3 * c, c), jnp.float32) * c ** -0.5,
            "b_qkv": jax.random.normal(keys[2], (3 * c,), jnp.float32) * 0.02,
            "w_out": jax.random.normal(keys[3], (c, c), jnp.float32) * c ** -0.5,
            "b_out": jax.random.normal(keys[4], (c,), jnp.float32) * 0.02,
            "ln2_w": jnp.ones((c,), jnp.float32),
            "ln2_b": jnp.zeros((c,), jnp.float32),
            "w_fc": jax.random.normal(keys[5], (mw, c), jnp.float32) * c ** -0.5,
            "b_fc": jax.random.normal(keys[6], (mw,), jnp.float32) * 0.02,
            "w_proj": jax.random.normal(keys[7], (c, mw), jnp.float32) * mw ** -0.5,
            "b_proj": jax.random.normal(keys[8], (c,), jnp.float32) * 0.02,
        })
    return params


if __name__ == "__main__":
    B, L, WIDTH, HEADS, LAYERS = 2, 8, 32, 4, 2

    key = jax.random.PRNGKey(0)
    kx, kp = jax.random.split(key)
    x = jax.random.normal(kx, (B, L, WIDTH), jnp.float32)
    params = init_params(kp, width=WIDTH, layers=LAYERS)

    fwd = jax.jit(functools.partial(custom_transformer_forward, heads=HEADS))
    out = fwd(x, params)
    jax.block_until_ready(out)

    ref = custom_transformer_ref(x, params, heads=HEADS)
    assert out.shape == (B, L, WIDTH)
    max_diff = float(jnp.max(jnp.abs(out - ref)))
    # Tolerance reflects bf16 MXU operands (f32 accumulation) in the kernels.
    assert jnp.allclose(out, ref, rtol=5e-2, atol=5e-2), max_diff

    print("KERNEL_OK")
</pallas_src>

<mosaic_0001>
module attributes {stable_mosaic.version = 11 : i64} {
  func.func @_attention_kernel(%arg0: i32, %arg1: memref<1x8x96xf32, #tpu.memory_space<vmem>>, %arg2: memref<1x8x32xf32, #tpu.memory_space<vmem>>) attributes {dimension_semantics = [#tpu.dimension_semantics<parallel>], iteration_bounds = array<i64: 2>, scalar_prefetch = 0 : i64, scratch_operands = 0 : i64, tpu.core_type = #tpu.core_type<tc>, window_params = [{transform_indices = @transform_0, window_bounds = array<i64: 1, 8, 96>}, {transform_indices = @transform_1, window_bounds = array<i64: 1, 8, 32>}]} {
    %c0 = arith.constant 0 : index
    %c0_0 = arith.constant 0 : index
    %c0_1 = arith.constant 0 : index
    %0 = vector.load %arg1[%c0, %c0_0, %c0_1] : memref<1x8x96xf32, #tpu.memory_space<vmem>>, vector<1x8x96xf32>
    %1 = vector.shape_cast %0 : vector<1x8x96xf32> to vector<8x96xf32>
    %2 = vector.extract_strided_slice %1 {offsets = [0, 0], sizes = [8, 8], strides = [1, 1]} : vector<8x96xf32> to vector<8x8xf32>
    %cst = arith.constant 0.353553385 : f32
    %3 = vector.broadcast %cst : f32 to vector<8x8xf32>
    %4 = arith.mulf %2, %3 : vector<8x8xf32>
    %5 = arith.truncf %4 : vector<8x8xf32> to vector<8x8xbf16>
    %6 = vector.extract_strided_slice %1 {offsets = [0, 32], sizes = [8, 8], strides = [1, 1]} : vector<8x96xf32> to vector<8x8xf32>
    %7 = arith.truncf %6 : vector<8x8xf32> to vector<8x8xbf16>
    %8 = vector.extract_strided_slice %1 {offsets = [0, 64], sizes = [8, 8], strides = [1, 1]} : vector<8x96xf32> to vector<8x8xf32>
    %9 = arith.truncf %8 : vector<8x8xf32> to vector<8x8xbf16>
    %cst_2 = arith.constant dense<0.000000e+00> : vector<8x8xf32>
    %10 = tpu.matmul %5, %7, %cst_2 {dimension_numbers = #tpu.dot_dimension_numbers<[1], [1], [0], [0], [0, 0, 1, 0], [], []>} : vector<8x8xbf16>, vector<8x8xbf16>, vector<8x8xf32> -> vector<8x8xf32>
    %cst_3 = arith.constant dense<0xFF800000> : vector<8xf32>
    %11 = vector.multi_reduction <maximumf>, %10, %cst_3 [1] : vector<8x8xf32> to vector<8xf32>
    %12 = vector.shape_cast %11 : vector<8xf32> to vector<8x1xf32>
    %13 = vector.broadcast %12 : vector<8x1xf32> to vector<8x8xf32>
    %14 = arith.subf %10, %13 : vector<8x8xf32>
    %15 = math.exp %14 : vector<8x8xf32>
    %cst_4 = arith.constant dense<0.000000e+00> : vector<8xf32>
    %16 = vector.multi_reduction <add>, %15, %cst_4 [1] : vector<8x8xf32> to vector<8xf32>
    %17 = vector.shape_cast %16 : vector<8xf32> to vector<8x1xf32>
    %18 = arith.truncf %15 : vector<8x8xf32> to vector<8x8xbf16>
    %cst_5 = arith.constant dense<0.000000e+00> : vector<8x8xf32>
    %19 = tpu.matmul %18, %9, %cst_5 {dimension_numbers = #tpu.dot_dimension_numbers<[1], [0], [0], [1], [0, 0, 1, 1], [], []>} : vector<8x8xbf16>, vector<8x8xbf16>, vector<8x8xf32> -> vector<8x8xf32>
    %20 = tpu.reciprocal %17 {approx = true} : vector<8x1xf32> -> vector<8x1xf32>
    %21 = vector.broadcast %20 : vector<8x1xf32> to vector<8x8xf32>
    %22 = arith.mulf %19, %21 : vector<8x8xf32>
    %23 = vector.extract_strided_slice %1 {offsets = [0, 8], sizes = [8, 8], strides = [1, 1]} : vector<8x96xf32> to vector<8x8xf32>
    %cst_6 = arith.constant 0.353553385 : f32
    %24 = vector.broadcast %cst_6 : f32 to vector<8x8xf32>
    %25 = arith.mulf %23, %24 : vector<8x8xf32>
    %26 = arith.truncf %25 : vector<8x8xf32> to vector<8x8xbf16>
    %27 = vector.extract_strided_slice %1 {offsets = [0, 40], sizes = [8, 8], strides = [1, 1]} : vector<8x96xf32> to vector<8x8xf32>
    %28 = arith.truncf %27 : vector<8x8xf32> to vector<8x8xbf16>
    %29 = vector.extract_strided_slice %1 {offsets = [0, 72], sizes = [8, 8], strides = [1, 1]} : vector<8x96xf32> to vector<8x8xf32>
    %30 = arith.truncf %29 : vector<8x8xf32> to vector<8x8xbf16>
    %cst_7 = arith.constant dense<0.000000e+00> : vector<8x8xf32>
    %31 = tpu.matmul %26, %28, %cst_7 {dimension_numbers = #tpu.dot_dimension_numbers<[1], [1], [0], [0], [0, 0, 1, 0], [], []>} : vector<8x8xbf16>, vector<8x8xbf16>, vector<8x8xf32> -> vector<8x8xf32>
    %cst_8 = arith.constant dense<0xFF800000> : vector<8xf32>
    %32 = vector.multi_reduction <maximumf>, %31, %cst_8 [1] : vector<8x8xf32> to vector<8xf32>
    %33 = vector.shape_cast %32 : vector<8xf32> to vector<8x1xf32>
    %34 = vector.broadcast %33 : vector<8x1xf32> to vector<8x8xf32>
    %35 = arith.subf %31, %34 : vector<8x8xf32>
    %36 = math.exp %35 : vector<8x8xf32>
    %cst_9 = arith.constant dense<0.000000e+00> : vector<8xf32>
    %37 = vector.multi_reduction <add>, %36, %cst_9 [1] : vector<8x8xf32> to vector<8xf32>
    %38 = vector.shape_cast %37 : vector<8xf32> to vector<8x1xf32>
    %39 = arith.truncf %36 : vector<8x8xf32> to vector<8x8xbf16>
    %cst_10 = arith.constant dense<0.000000e+00> : vector<8x8xf32>
    %40 = tpu.matmul %39, %30, %cst_10 {dimension_numbers = #tpu.dot_dimension_numbers<[1], [0], [0], [1], [0, 0, 1, 1], [], []>} : vector<8x8xbf16>, vector<8x8xbf16>, vector<8x8xf32> -> vector<8x8xf32>
    %41 = tpu.reciprocal %38 {approx = true} : vector<8x1xf32> -> vector<8x1xf32>
    %42 = vector.broadcast %41 : vector<8x1xf32> to vector<8x8xf32>
    %43 = arith.mulf %40, %42 : vector<8x8xf32>
    %44 = vector.extract_strided_slice %1 {offsets = [0, 16], sizes = [8, 8], strides = [1, 1]} : vector<8x96xf32> to vector<8x8xf32>
    %cst_11 = arith.constant 0.353553385 : f32
    %45 = vector.broadcast %cst_11 : f32 to vector<8x8xf32>
    %46 = arith.mulf %44, %45 : vector<8x8xf32>
    %47 = arith.truncf %46 : vector<8x8xf32> to vector<8x8xbf16>
    %48 = vector.extract_strided_slice %1 {offsets = [0, 48], sizes = [8, 8], strides = [1, 1]} : vector<8x96xf32> to vector<8x8xf32>
    %49 = arith.truncf %48 : vector<8x8xf32> to vector<8x8xbf16>
    %50 = vector.extract_strided_slice %1 {offsets = [0, 80], sizes = [8, 8], strides = [1, 1]} : vector<8x96xf32> to vector<8x8xf32>
    %51 = arith.truncf %50 : vector<8x8xf32> to vector<8x8xbf16>
    %cst_12 = arith.constant dense<0.000000e+00> : vector<8x8xf32>
    %52 = tpu.matmul %47, %49, %cst_12 {dimension_numbers = #tpu.dot_dimension_numbers<[1], [1], [0], [0], [0, 0, 1, 0], [], []>} : vector<8x8xbf16>, vector<8x8xbf16>, vector<8x8xf32> -> vector<8x8xf32>
    %cst_13 = arith.constant dense<0xFF800000> : vector<8xf32>
    %53 = vector.multi_reduction <maximumf>, %52, %cst_13 [1] : vector<8x8xf32> to vector<8xf32>
    %54 = vector.shape_cast %53 : vector<8xf32> to vector<8x1xf32>
    %55 = vector.broadcast %54 : vector<8x1xf32> to vector<8x8xf32>
    %56 = arith.subf %52, %55 : vector<8x8xf32>
    %57 = math.exp %56 : vector<8x8xf32>
    %cst_14 = arith.constant dense<0.000000e+00> : vector<8xf32>
    %58 = vector.multi_reduction <add>, %57, %cst_14 [1] : vector<8x8xf32> to vector<8xf32>
    %59 = vector.shape_cast %58 : vector<8xf32> to vector<8x1xf32>
    %60 = arith.truncf %57 : vector<8x8xf32> to vector<8x8xbf16>
    %cst_15 = arith.constant dense<0.000000e+00> : vector<8x8xf32>
    %61 = tpu.matmul %60, %51, %cst_15 {dimension_numbers = #tpu.dot_dimension_numbers<[1], [0], [0], [1], [0, 0, 1, 1], [], []>} : vector<8x8xbf16>, vector<8x8xbf16>, vector<8x8xf32> -> vector<8x8xf32>
    %62 = tpu.reciprocal %59 {approx = true} : vector<8x1xf32> -> vector<8x1xf32>
    %63 = vector.broadcast %62 : vector<8x1xf32> to vector<8x8xf32>
    %64 = arith.mulf %61, %63 : vector<8x8xf32>
    %65 = vector.extract_strided_slice %1 {offsets = [0, 24], sizes = [8, 8], strides = [1, 1]} : vector<8x96xf32> to vector<8x8xf32>
    %cst_16 = arith.constant 0.353553385 : f32
    %66 = vector.broadcast %cst_16 : f32 to vector<8x8xf32>
    %67 = arith.mulf %65, %66 : vector<8x8xf32>
    %68 = arith.truncf %67 : vector<8x8xf32> to vector<8x8xbf16>
    %69 = vector.extract_strided_slice %1 {offsets = [0, 56], sizes = [8, 8], strides = [1, 1]} : vector<8x96xf32> to vector<8x8xf32>
    %70 = arith.truncf %69 : vector<8x8xf32> to vector<8x8xbf16>
    %71 = vector.extract_strided_slice %1 {offsets = [0, 88], sizes = [8, 8], strides = [1, 1]} : vector<8x96xf32> to vector<8x8xf32>
    %72 = arith.truncf %71 : vector<8x8xf32> to vector<8x8xbf16>
    %cst_17 = arith.constant dense<0.000000e+00> : vector<8x8xf32>
    %73 = tpu.matmul %68, %70, %cst_17 {dimension_numbers = #tpu.dot_dimension_numbers<[1], [1], [0], [0], [0, 0, 1, 0], [], []>} : vector<8x8xbf16>, vector<8x8xbf16>, vector<8x8xf32> -> vector<8x8xf32>
    %cst_18 = arith.constant dense<0xFF800000> : vector<8xf32>
    %74 = vector.multi_reduction <maximumf>, %73, %cst_18 [1] : vector<8x8xf32> to vector<8xf32>
    %75 = vector.shape_cast %74 : vector<8xf32> to vector<8x1xf32>
    %76 = vector.broadcast %75 : vector<8x1xf32> to vector<8x8xf32>
    %77 = arith.subf %73, %76 : vector<8x8xf32>
    %78 = math.exp %77 : vector<8x8xf32>
    %cst_19 = arith.constant dense<0.000000e+00> : vector<8xf32>
    %79 = vector.multi_reduction <add>, %78, %cst_19 [1] : vector<8x8xf32> to vector<8xf32>
    %80 = vector.shape_cast %79 : vector<8xf32> to vector<8x1xf32>
    %81 = arith.truncf %78 : vector<8x8xf32> to vector<8x8xbf16>
    %cst_20 = arith.constant dense<0.000000e+00> : vector<8x8xf32>
    %82 = tpu.matmul %81, %72, %cst_20 {dimension_numbers = #tpu.dot_dimension_numbers<[1], [0], [0], [1], [0, 0, 1, 1], [], []>} : vector<8x8xbf16>, vector<8x8xbf16>, vector<8x8xf32> -> vector<8x8xf32>
    %83 = tpu.reciprocal %80 {approx = true} : vector<8x1xf32> -> vector<8x1xf32>
    %84 = vector.broadcast %83 : vector<8x1xf32> to vector<8x8xf32>
    %85 = arith.mulf %82, %84 : vector<8x8xf32>
    %86 = tpu.concatenate %22, %43, %64, %85 in 1 : vector<8x8xf32>, vector<8x8xf32>, vector<8x8xf32>, vector<8x8xf32> -> vector<8x32xf32>
    %c0_21 = arith.constant 0 : index
    %c0_22 = arith.constant 0 : index
    %c0_23 = arith.constant 0 : index
    %87 = vector.load %arg2[%c0_21, %c0_22, %c0_23] : memref<1x8x32xf32, #tpu.memory_space<vmem>>, vector<1x8x32xf32>
    %88 = vector.shape_cast %87 : vector<1x8x32xf32> to vector<8x32xf32>
    %89 = vector.shape_cast %86 : vector<8x32xf32> to vector<1x8x32xf32>
    tpu.vector_store %arg2[%c0_21, %c0_22, %c0_23], %89 {strides = array<i32>} : memref<1x8x32xf32, #tpu.memory_space<vmem>>, vector<1x8x32xf32>,
    return
  }
  func.func @transform_0(%arg0: i32) -> (i32, i32, i32) {
    %c0_i32 = arith.constant 0 : i32
    %c0_i32_0 = arith.constant 0 : i32
    %c0_i32_1 = arith.constant 0 : i32
    return %arg0, %c0_i32, %c0_i32_0 : i32, i32, i32
  }
  func.func @transform_1(%arg0: i32) -> (i32, i32, i32) {
    %c0_i32 = arith.constant 0 : i32
    %c0_i32_0 = arith.constant 0 : i32
    %c0_i32_1 = arith.constant 0 : i32
    return %arg0, %c0_i32, %c0_i32_0 : i32, i32, i32
  }
}

module attributes {stable_mosaic.version = 11 : i64} {
  func.func @_linear_kernel(%arg0: i32, %arg1: i32, %arg2: i32, %arg3: memref<16x32xf32, #tpu.memory_space<vmem>>, %arg4: memref<32x32xf32, #tpu.memory_space<vmem>>, %arg5: memref<1x32xf32, #tpu.memory_space<vmem>>, %arg6: memref<16x32xf32, #tpu.memory_space<vmem>>, %arg7: memref<16x32xf32, #tpu.memory_space<vmem>>, %arg8: memref<16x32xf32, #tpu.memory_space<vmem>>) attributes {dimension_semantics = [#tpu.dimension_semantics<parallel>, #tpu.dimension_semantics<parallel>, #tpu.dimension_semantics<arbitrary>], iteration_bounds = array<i64: 1, 1, 1>, scalar_prefetch = 0 : i64, scratch_operands = 1 : i64, tpu.core_type = #tpu.core_type<tc>, window_params = [{transform_indices = @transform_0, window_bounds = array<i64: 16, 32>}, {transform_indices = @transform_1, window_bounds = array<i64: 32, 32>}, {transform_indices = @transform_2, window_bounds = array<i64: 1, 32>}, {transform_indices = @transform_3, window_bounds = array<i64: 16, 32>}, {transform_indices = @transform_4, window_bounds = array<i64: 16, 32>}]} {
    %c0_i32 = arith.constant 0 : i32
    %0 = arith.cmpi eq, %arg2, %c0_i32 : i32
    %1 = arith.extui %0 : i1 to i32
    %c0_i32_0 = arith.constant 0 : i32
    %2 = arith.cmpi ne, %1, %c0_i32_0 : i32
    scf.if %2 {
      %cst_10 = arith.constant 0.000000e+00 : f32
      %14 = vector.broadcast %cst_10 : f32 to vector<16x32xf32>
      %c0_11 = arith.constant 0 : index
      %c0_12 = arith.constant 0 : index
      %15 = vector.load %arg8[%c0_11, %c0_12] : memref<16x32xf32, #tpu.memory_space<vmem>>, vector<16x32xf32>
      tpu.vector_store %arg8[%c0_11, %c0_12], %14 {strides = array<i32>} : memref<16x32xf32, #tpu.memory_space<vmem>>, vector<16x32xf32>,
    } else {
    }
    %c0 = arith.constant 0 : index
    %c0_1 = arith.constant 0 : index
    %3 = vector.load %arg3[%c0, %c0_1] : memref<16x32xf32, #tpu.memory_space<vmem>>, vector<16x32xf32>
    %4 = arith.truncf %3 : vector<16x32xf32> to vector<16x32xbf16>
    %c0_2 = arith.constant 0 : index
    %c0_3 = arith.constant 0 : index
    %5 = vector.load %arg4[%c0_2, %c0_3] : memref<32x32xf32, #tpu.memory_space<vmem>>, vector<32x32xf32>
    %6 = arith.truncf %5 : vector<32x32xf32> to vector<32x32xbf16>
    %c0_4 = arith.constant 0 : index
    %c0_5 = arith.constant 0 : index
    %7 = vector.load %arg8[%c0_4, %c0_5] : memref<16x32xf32, #tpu.memory_space<vmem>>, vector<16x32xf32>
    %cst = arith.constant dense<0.000000e+00> : vector<16x32xf32>
    %8 = tpu.matmul %4, %6, %cst {dimension_numbers = #tpu.dot_dimension_numbers<[1], [1], [0], [0], [0, 0, 1, 0], [], []>} : vector<16x32xbf16>, vector<32x32xbf16>, vector<16x32xf32> -> vector<16x32xf32>
    %9 = arith.addf %7, %8 : vector<16x32xf32>
    %c0_6 = arith.constant 0 : index
    %c0_7 = arith.constant 0 : index
    %10 = vector.load %arg8[%c0_6, %c0_7] : memref<16x32xf32, #tpu.memory_space<vmem>>, vector<16x32xf32>
    tpu.vector_store %arg8[%c0_6, %c0_7], %9 {strides = array<i32>} : memref<16x32xf32, #tpu.memory_space<vmem>>, vector<16x32xf32>,
    %c0_i32_8 = arith.constant 0 : i32
    %11 = arith.cmpi eq, %arg2, %c0_i32_8 : i32
    %12 = arith.extui %11 : i1 to i32
    %c0_i32_9 = arith.constant 0 : i32
    %13 = arith.cmpi ne, %12, %c0_i32_9 : i32
    scf.if %13 {
      %c0_10 = arith.constant 0 : index
      %c0_11 = arith.constant 0 : index
      %14 = vector.load %arg8[%c0_10, %c0_11] : memref<16x32xf32, #tpu.memory_space<vmem>>, vector<16x32xf32>
      %c0_12 = arith.constant 0 : index
      %c0_13 = arith.constant 0 : index
      %15 = vector.load %arg5[%c0_12, %c0_13] : memref<1x32xf32, #tpu.memory_space<vmem>>, vector<1x32xf32>
      %16 = vector.broadcast %15 : vector<1x32xf32> to vector<16x32xf32>
      %17 = arith.addf %14, %16 : vector<16x32xf32>
      %c0_14 = arith.constant 0 : index
      %c0_15 = arith.constant 0 : index
      %18 = vector.load %arg6[%c0_14, %c0_15] : memref<16x32xf32, #tpu.memory_space<vmem>>, vector<16x32xf32>
      %19 = arith.addf %17, %18 : vector<16x32xf32>
      %c0_16 = arith.constant 0 : index
      %c0_17 = arith.constant 0 : index
      %20 = vector.load %arg7[%c0_16, %c0_17] : memref<16x32xf32, #tpu.memory_space<vmem>>, vector<16x32xf32>
      tpu.vector_store %arg7[%c0_16, %c0_17], %19 {strides = array<i32>} : memref<16x32xf32, #tpu.memory_space<vmem>>, vector<16x32xf32>,
    } else {
    }
    return
  }
  func.func @transform_0(%arg0: i32, %arg1: i32, %arg2: i32) -> (i32, i32) {
    %c0_i32 = arith.constant 0 : i32
    return %arg0, %arg2 : i32, i32
  }
  func.func @transform_1(%arg0: i32, %arg1: i32, %arg2: i32) -> (i32, i32) {
    %c0_i32 = arith.constant 0 : i32
    return %arg1, %arg2 : i32, i32
  }
  func.func @transform_2(%arg0: i32, %arg1: i32, %arg2: i32) -> (i32, i32) {
    %c0_i32 = arith.constant 0 : i32
    %c0_i32_0 = arith.constant 0 : i32
    return %c0_i32, %arg1 : i32, i32
  }
  func.func @transform_3(%arg0: i32, %arg1: i32, %arg2: i32) -> (i32, i32) {
    %c0_i32 = arith.constant 0 : i32
    return %arg0, %arg1 : i32, i32
  }
  func.func @transform_4(%arg0: i32, %arg1: i32, %arg2: i32) -> (i32, i32) {
    %c0_i32 = arith.constant 0 : i32
    return %arg0, %arg1 : i32, i32
  }
}

module attributes {stable_mosaic.version = 11 : i64} {
  func.func @_linear_kernel(%arg0: i32, %arg1: i32, %arg2: i32, %arg3: memref<16x32xf32, #tpu.memory_space<vmem>>, %arg4: memref<96x32xf32, #tpu.memory_space<vmem>>, %arg5: memref<1x96xf32, #tpu.memory_space<vmem>>, %arg6: memref<1x32xf32, #tpu.memory_space<vmem>>, %arg7: memref<1x32xf32, #tpu.memory_space<vmem>>, %arg8: memref<16x96xf32, #tpu.memory_space<vmem>>, %arg9: memref<16x96xf32, #tpu.memory_space<vmem>>) attributes {dimension_semantics = [#tpu.dimension_semantics<parallel>, #tpu.dimension_semantics<parallel>, #tpu.dimension_semantics<arbitrary>], iteration_bounds = array<i64: 1, 1, 1>, scalar_prefetch = 0 : i64, scratch_operands = 1 : i64, tpu.core_type = #tpu.core_type<tc>, window_params = [{transform_indices = @transform_0, window_bounds = array<i64: 16, 32>}, {transform_indices = @transform_1, window_bounds = array<i64: 96, 32>}, {transform_indices = @transform_2, window_bounds = array<i64: 1, 96>}, {pipeline_mode = #tpu.pipeline_mode<synchronous>, transform_indices = @transform_3, window_bounds = array<i64: 1, 32>}, {pipeline_mode = #tpu.pipeline_mode<synchronous>, transform_indices = @transform_4, window_bounds = array<i64: 1, 32>}, {transform_indices = @transform_5, window_bounds = array<i64: 16, 96>}]} {
    %c0_i32 = arith.constant 0 : i32
    %0 = arith.cmpi eq, %arg2, %c0_i32 : i32
    %1 = arith.extui %0 : i1 to i32
    %c0_i32_0 = arith.constant 0 : i32
    %2 = arith.cmpi ne, %1, %c0_i32_0 : i32
    scf.if %2 {
      %cst_19 = arith.constant 0.000000e+00 : f32
      %36 = vector.broadcast %cst_19 : f32 to vector<16x96xf32>
      %c0_20 = arith.constant 0 : index
      %c0_21 = arith.constant 0 : index
      %37 = vector.load %arg9[%c0_20, %c0_21] : memref<16x96xf32, #tpu.memory_space<vmem>>, vector<16x96xf32>
      tpu.vector_store %arg9[%c0_20, %c0_21], %36 {strides = array<i32>} : memref<16x96xf32, #tpu.memory_space<vmem>>, vector<16x96xf32>,
    } else {
    }
    %c0 = arith.constant 0 : index
    %c0_1 = arith.constant 0 : index
    %3 = vector.load %arg3[%c0, %c0_1] : memref<16x32xf32, #tpu.memory_space<vmem>>, vector<16x32xf32>
    %cst = arith.constant dense<0.000000e+00> : vector<16xf32>
    %4 = vector.multi_reduction <add>, %3, %cst [1] : vector<16x32xf32> to vector<16xf32>
    %5 = vector.shape_cast %4 : vector<16xf32> to vector<16x1xf32>
    %cst_2 = arith.constant 3.200000e+01 : f32
    %6 = vector.broadcast %cst_2 : f32 to vector<16x1xf32>
    %7 = arith.divf %5, %6 : vector<16x1xf32>
    %8 = vector.broadcast %7 : vector<16x1xf32> to vector<16x32xf32>
    %9 = arith.subf %3, %8 : vector<16x32xf32>
    %10 = arith.mulf %9, %9 : vector<16x32xf32>
    %cst_3 = arith.constant dense<0.000000e+00> : vector<16xf32>
    %11 = vector.multi_reduction <add>, %10, %cst_3 [1] : vector<16x32xf32> to vector<16xf32>
    %12 = vector.shape_cast %11 : vector<16xf32> to vector<16x1xf32>
    %cst_4 = arith.constant 3.200000e+01 : f32
    %13 = vector.broadcast %cst_4 : f32 to vector<16x1xf32>
    %14 = arith.divf %12, %13 : vector<16x1xf32>
    %cst_5 = arith.constant 9.99999974E-6 : f32
    %15 = vector.broadcast %cst_5 : f32 to vector<16x1xf32>
    %16 = arith.addf %14, %15 : vector<16x1xf32>
    %17 = math.rsqrt %16 : vector<16x1xf32>
    %18 = vector.broadcast %17 : vector<16x1xf32> to vector<16x32xf32>
    %19 = arith.mulf %9, %18 : vector<16x32xf32>
    %c0_6 = arith.constant 0 : index
    %c0_7 = arith.constant 0 : index
    %20 = vector.load %arg6[%c0_6, %c0_7] : memref<1x32xf32, #tpu.memory_space<vmem>>, vector<1x32xf32>
    %21 = vector.broadcast %20 : vector<1x32xf32> to vector<16x32xf32>
    %22 = arith.mulf %19, %21 : vector<16x32xf32>
    %c0_8 = arith.constant 0 : index
    %c0_9 = arith.constant 0 : index
    %23 = vector.load %arg7[%c0_8, %c0_9] : memref<1x32xf32, #tpu.memory_space<vmem>>, vector<1x32xf32>
    %24 = vector.broadcast %23 : vector<1x32xf32> to vector<16x32xf32>
    %25 = arith.addf %22, %24 : vector<16x32xf32>
    %26 = arith.truncf %25 : vector<16x32xf32> to vector<16x32xbf16>
    %c0_10 = arith.constant 0 : index
    %c0_11 = arith.constant 0 : index
    %27 = vector.load %arg4[%c0_10, %c0_11] : memref<96x32xf32, #tpu.memory_space<vmem>>, vector<96x32xf32>
    %28 = arith.truncf %27 : vector<96x32xf32> to vector<96x32xbf16>
    %c0_12 = arith.constant 0 : index
    %c0_13 = arith.constant 0 : index
    %29 = vector.load %arg9[%c0_12, %c0_13] : memref<16x96xf32, #tpu.memory_space<vmem>>, vector<16x96xf32>
    %cst_14 = arith.constant dense<0.000000e+00> : vector<16x96xf32>
    %30 = tpu.matmul %26, %28, %cst_14 {dimension_numbers = #tpu.dot_dimension_numbers<[1], [1], [0], [0], [0, 0, 1, 0], [], []>} : vector<16x32xbf16>, vector<96x32xbf16>, vector<16x96xf32> -> vector<16x96xf32>
    %31 = arith.addf %29, %30 : vector<16x96xf32>
    %c0_15 = arith.constant 0 : index
    %c0_16 = arith.constant 0 : index
    %32 = vector.load %arg9[%c0_15, %c0_16] : memref<16x96xf32, #tpu.memory_space<vmem>>, vector<16x96xf32>
    tpu.vector_store %arg9[%c0_15, %c0_16], %31 {strides = array<i32>} : memref<16x96xf32, #tpu.memory_space<vmem>>, vector<16x96xf32>,
    %c0_i32_17 = arith.constant 0 : i32
    %33 = arith.cmpi eq, %arg2, %c0_i32_17 : i32
    %34 = arith.extui %33 : i1 to i32
    %c0_i32_18 = arith.constant 0 : i32
    %35 = arith.cmpi ne, %34, %c0_i32_18 : i32
    scf.if %35 {
      %c0_19 = arith.constant 0 : index
      %c0_20 = arith.constant 0 : index
      %36 = vector.load %arg9[%c0_19, %c0_20] : memref<16x96xf32, #tpu.memory_space<vmem>>, vector<16x96xf32>
      %c0_21 = arith.constant 0 : index
      %c0_22 = arith.constant 0 : index
      %37 = vector.load %arg5[%c0_21, %c0_22] : memref<1x96xf32, #tpu.memory_space<vmem>>, vector<1x96xf32>
      %38 = vector.broadcast %37 : vector<1x96xf32> to vector<16x96xf32>
      %39 = arith.addf %36, %38 : vector<16x96xf32>
      %c0_23 = arith.constant 0 : index
      %c0_24 = arith.constant 0 : index
      %40 = vector.load %arg8[%c0_23, %c0_24] : memref<16x96xf32, #tpu.memory_space<vmem>>, vector<16x96xf32>
      tpu.vector_store %arg8[%c0_23, %c0_24], %39 {strides = array<i32>} : memref<16x96xf32, #tpu.memory_space<vmem>>, vector<16x96xf32>,
    } else {
    }
    return
  }
  func.func @transform_0(%arg0: i32, %arg1: i32, %arg2: i32) -> (i32, i32) {
    %c0_i32 = arith.constant 0 : i32
    return %arg0, %arg2 : i32, i32
  }
  func.func @transform_1(%arg0: i32, %arg1: i32, %arg2: i32) -> (i32, i32) {
    %c0_i32 = arith.constant 0 : i32
    return %arg1, %arg2 : i32, i32
  }
  func.func @transform_2(%arg0: i32, %arg1: i32, %arg2: i32) -> (i32, i32) {
    %c0_i32 = arith.constant 0 : i32
    %c0_i32_0 = arith.constant 0 : i32
    return %c0_i32, %arg1 : i32, i32
  }
  func.func @transform_3(%arg0: i32, %arg1: i32, %arg2: i32) -> (i32, i32) {
    %c0_i32 = arith.constant 0 : i32
    %c0_i32_0 = arith.constant 0 : i32
    %c0_i32_1 = arith.constant 0 : i32
    return %c0_i32, %c0_i32_0 : i32, i32
  }
  func.func @transform_4(%arg0: i32, %arg1: i32, %arg2: i32) -> (i32, i32) {
    %c0_i32 = arith.constant 0 : i32
    %c0_i32_0 = arith.constant 0 : i32
    %c0_i32_1 = arith.constant 0 : i32
    return %c0_i32, %c0_i32_0 : i32, i32
  }
  func.func @transform_5(%arg0: i32, %arg1: i32, %arg2: i32) -> (i32, i32) {
    %c0_i32 = arith.constant 0 : i32
    return %arg0, %arg1 : i32, i32
  }
}

module attributes {stable_mosaic.version = 11 : i64} {
  func.func @_linear_kernel(%arg0: i32, %arg1: i32, %arg2: i32, %arg3: memref<16x32xf32, #tpu.memory_space<vmem>>, %arg4: memref<128x32xf32, #tpu.memory_space<vmem>>, %arg5: memref<1x128xf32, #tpu.memory_space<vmem>>, %arg6: memref<1x32xf32, #tpu.memory_space<vmem>>, %arg7: memref<1x32xf32, #tpu.memory_space<vmem>>, %arg8: memref<16x128xf32, #tpu.memory_space<vmem>>, %arg9: memref<16x128xf32, #tpu.memory_space<vmem>>) attributes {dimension_semantics = [#tpu.dimension_semantics<parallel>, #tpu.dimension_semantics<parallel>, #tpu.dimension_semantics<arbitrary>], iteration_bounds = array<i64: 1, 1, 1>, scalar_prefetch = 0 : i64, scratch_operands = 1 : i64, tpu.core_type = #tpu.core_type<tc>, window_params = [{transform_indices = @transform_0, window_bounds = array<i64: 16, 32>}, {transform_indices = @transform_1, window_bounds = array<i64: 128, 32>}, {transform_indices = @transform_2, window_bounds = array<i64: 1, 128>}, {pipeline_mode = #tpu.pipeline_mode<synchronous>, transform_indices = @transform_3, window_bounds = array<i64: 1, 32>}, {pipeline_mode = #tpu.pipeline_mode<synchronous>, transform_indices = @transform_4, window_bounds = array<i64: 1, 32>}, {transform_indices = @transform_5, window_bounds = array<i64: 16, 128>}]} {
    %c0_i32 = arith.constant 0 : i32
    %0 = arith.cmpi eq, %arg2, %c0_i32 : i32
    %1 = arith.extui %0 : i1 to i32
    %c0_i32_0 = arith.constant 0 : i32
    %2 = arith.cmpi ne, %1, %c0_i32_0 : i32
    scf.if %2 {
      %cst_19 = arith.constant 0.000000e+00 : f32
      %36 = vector.broadcast %cst_19 : f32 to vector<16x128xf32>
      %c0_20 = arith.constant 0 : index
      %c0_21 = arith.constant 0 : index
      %37 = vector.load %arg9[%c0_20, %c0_21] : memref<16x128xf32, #tpu.memory_space<vmem>>, vector<16x128xf32>
      tpu.vector_store %arg9[%c0_20, %c0_21], %36 {strides = array<i32>} : memref<16x128xf32, #tpu.memory_space<vmem>>, vector<16x128xf32>,
    } else {
    }
    %c0 = arith.constant 0 : index
    %c0_1 = arith.constant 0 : index
    %3 = vector.load %arg3[%c0, %c0_1] : memref<16x32xf32, #tpu.memory_space<vmem>>, vector<16x32xf32>
    %cst = arith.constant dense<0.000000e+00> : vector<16xf32>
    %4 = vector.multi_reduction <add>, %3, %cst [1] : vector<16x32xf32> to vector<16xf32>
    %5 = vector.shape_cast %4 : vector<16xf32> to vector<16x1xf32>
    %cst_2 = arith.constant 3.200000e+01 : f32
    %6 = vector.broadcast %cst_2 : f32 to vector<16x1xf32>
    %7 = arith.divf %5, %6 : vector<16x1xf32>
    %8 = vector.broadcast %7 : vector<16x1xf32> to vector<16x32xf32>
    %9 = arith.subf %3, %8 : vector<16x32xf32>
    %10 = arith.mulf %9, %9 : vector<16x32xf32>
    %cst_3 = arith.constant dense<0.000000e+00> : vector<16xf32>
    %11 = vector.multi_reduction <add>, %10, %cst_3 [1] : vector<16x32xf32> to vector<16xf32>
    %12 = vector.shape_cast %11 : vector<16xf32> to vector<16x1xf32>
    %cst_4 = arith.constant 3.200000e+01 : f32
    %13 = vector.broadcast %cst_4 : f32 to vector<16x1xf32>
    %14 = arith.divf %12, %13 : vector<16x1xf32>
    %cst_5 = arith.constant 9.99999974E-6 : f32
    %15 = vector.broadcast %cst_5 : f32 to vector<16x1xf32>
    %16 = arith.addf %14, %15 : vector<16x1xf32>
    %17 = math.rsqrt %16 : vector<16x1xf32>
    %18 = vector.broadcast %17 : vector<16x1xf32> to vector<16x32xf32>
    %19 = arith.mulf %9, %18 : vector<16x32xf32>
    %c0_6 = arith.constant 0 : index
    %c0_7 = arith.constant 0 : index
    %20 = vector.load %arg6[%c0_6, %c0_7] : memref<1x32xf32, #tpu.memory_space<vmem>>, vector<1x32xf32>
    %21 = vector.broadcast %20 : vector<1x32xf32> to vector<16x32xf32>
    %22 = arith.mulf %19, %21 : vector<16x32xf32>
    %c0_8 = arith.constant 0 : index
    %c0_9 = arith.constant 0 : index
    %23 = vector.load %arg7[%c0_8, %c0_9] : memref<1x32xf32, #tpu.memory_space<vmem>>, vector<1x32xf32>
    %24 = vector.broadcast %23 : vector<1x32xf32> to vector<16x32xf32>
    %25 = arith.addf %22, %24 : vector<16x32xf32>
    %26 = arith.truncf %25 : vector<16x32xf32> to vector<16x32xbf16>
    %c0_10 = arith.constant 0 : index
    %c0_11 = arith.constant 0 : index
    %27 = vector.load %arg4[%c0_10, %c0_11] : memref<128x32xf32, #tpu.memory_space<vmem>>, vector<128x32xf32>
    %28 = arith.truncf %27 : vector<128x32xf32> to vector<128x32xbf16>
    %c0_12 = arith.constant 0 : index
    %c0_13 = arith.constant 0 : index
    %29 = vector.load %arg9[%c0_12, %c0_13] : memref<16x128xf32, #tpu.memory_space<vmem>>, vector<16x128xf32>
    %cst_14 = arith.constant dense<0.000000e+00> : vector<16x128xf32>
    %30 = tpu.matmul %26, %28, %cst_14 {dimension_numbers = #tpu.dot_dimension_numbers<[1], [1], [0], [0], [0, 0, 1, 0], [], []>} : vector<16x32xbf16>, vector<128x32xbf16>, vector<16x128xf32> -> vector<16x128xf32>
    %31 = arith.addf %29, %30 : vector<16x128xf32>
    %c0_15 = arith.constant 0 : index
    %c0_16 = arith.constant 0 : index
    %32 = vector.load %arg9[%c0_15, %c0_16] : memref<16x128xf32, #tpu.memory_space<vmem>>, vector<16x128xf32>
    tpu.vector_store %arg9[%c0_15, %c0_16], %31 {strides = array<i32>} : memref<16x128xf32, #tpu.memory_space<vmem>>, vector<16x128xf32>,
    %c0_i32_17 = arith.constant 0 : i32
    %33 = arith.cmpi eq, %arg2, %c0_i32_17 : i32
    %34 = arith.extui %33 : i1 to i32
    %c0_i32_18 = arith.constant 0 : i32
    %35 = arith.cmpi ne, %34, %c0_i32_18 : i32
    scf.if %35 {
      %c0_19 = arith.constant 0 : index
      %c0_20 = arith.constant 0 : index
      %36 = vector.load %arg9[%c0_19, %c0_20] : memref<16x128xf32, #tpu.memory_space<vmem>>, vector<16x128xf32>
      %c0_21 = arith.constant 0 : index
      %c0_22 = arith.constant 0 : index
      %37 = vector.load %arg5[%c0_21, %c0_22] : memref<1x128xf32, #tpu.memory_space<vmem>>, vector<1x128xf32>
      %38 = vector.broadcast %37 : vector<1x128xf32> to vector<16x128xf32>
      %39 = arith.addf %36, %38 : vector<16x128xf32>
      %cst_23 = arith.constant 5.000000e-01 : f32
      %40 = vector.broadcast %cst_23 : f32 to vector<16x128xf32>
      %41 = arith.mulf %40, %39 : vector<16x128xf32>
      %cst_24 = arith.constant 0.707106769 : f32
      %42 = vector.broadcast %cst_24 : f32 to vector<16x128xf32>
      %43 = arith.mulf %39, %42 : vector<16x128xf32>
      %44 = math.absf %43 : vector<16x128xf32>
      %cst_25 = arith.constant 0.327591091 : f32
      %45 = vector.broadcast %cst_25 : f32 to vector<16x128xf32>
      %46 = arith.mulf %45, %44 : vector<16x128xf32>
      %cst_26 = arith.constant 1.000000e+00 : f32
      %47 = vector.broadcast %cst_26 : f32 to vector<16x128xf32>
      %48 = arith.addf %47, %46 : vector<16x128xf32>
      %cst_27 = arith.constant 1.000000e+00 : f32
      %49 = vector.broadcast %cst_27 : f32 to vector<16x128xf32>
      %50 = arith.divf %49, %48 : vector<16x128xf32>
      %cst_28 = arith.constant 1.06140542 : f32
      %51 = vector.broadcast %cst_28 : f32 to vector<16x128xf32>
      %52 = arith.mulf %51, %50 : vector<16x128xf32>
      %cst_29 = arith.constant -1.45315206 : f32
      %53 = vector.broadcast %cst_29 : f32 to vector<16x128xf32>
      %54 = arith.addf %52, %53 : vector<16x128xf32>
      %55 = arith.mulf %54, %50 : vector<16x128xf32>
      %cst_30 = arith.constant 1.42141378 : f32
      %56 = vector.broadcast %cst_30 : f32 to vector<16x128xf32>
      %57 = arith.addf %55, %56 : vector<16x128xf32>
      %58 = arith.mulf %57, %50 : vector<16x128xf32>
      %cst_31 = arith.constant -0.284496725 : f32
      %59 = vector.broadcast %cst_31 : f32 to vector<16x128xf32>
      %60 = arith.addf %58, %59 : vector<16x128xf32>
      %61 = arith.mulf %60, %50 : vector<16x128xf32>
      %cst_32 = arith.constant 0.254829586 : f32
      %62 = vector.broadcast %cst_32 : f32 to vector<16x128xf32>
      %63 = arith.addf %61, %62 : vector<16x128xf32>
      %64 = arith.mulf %63, %50 : vector<16x128xf32>
      %cst_33 = arith.constant 0.000000e+00 : f32
      %65 = vector.broadcast %cst_33 : f32 to vector<16x128xf32>
      %66 = arith.subf %65, %44 : vector<16x128xf32>
      %67 = arith.mulf %66, %44 : vector<16x128xf32>
      %68 = math.exp %67 : vector<16x128xf32>
      %69 = arith.mulf %64, %68 : vector<16x128xf32>
      %cst_34 = arith.constant 1.000000e+00 : f32
      %70 = vector.broadcast %cst_34 : f32 to vector<16x128xf32>
      %71 = arith.subf %70, %69 : vector<16x128xf32>
      %cst_35 = arith.constant 0.000000e+00 : f32
      %72 = vector.broadcast %cst_35 : f32 to vector<16x128xf32>
      %73 = arith.cmpf oge, %43, %72 : vector<16x128xf32>
      %cst_36 = arith.constant 0.000000e+00 : f32
      %74 = vector.broadcast %cst_36 : f32 to vector<16x128xf32>
      %75 = arith.subf %74, %71 : vector<16x128xf32>
      %76 = arith.select %73, %71, %75 : vector<16x128xi1>, vector<16x128xf32>
      %cst_37 = arith.constant 1.000000e+00 : f32
      %77 = vector.broadcast %cst_37 : f32 to vector<16x128xf32>
      %78 = arith.addf %77, %76 : vector<16x128xf32>
      %79 = arith.mulf %41, %78 : vector<16x128xf32>
      %c0_38 = arith.constant 0 : index
      %c0_39 = arith.constant 0 : index
      %80 = vector.load %arg8[%c0_38, %c0_39] : memref<16x128xf32, #tpu.memory_space<vmem>>, vector<16x128xf32>
      tpu.vector_store %arg8[%c0_38, %c0_39], %79 {strides = array<i32>} : memref<16x128xf32, #tpu.memory_space<vmem>>, vector<16x128xf32>,
    } else {
    }
    return
  }
  func.func @transform_0(%arg0: i32, %arg1: i32, %arg2: i32) -> (i32, i32) {
    %c0_i32 = arith.constant 0 : i32
    return %arg0, %arg2 : i32, i32
  }
  func.func @transform_1(%arg0: i32, %arg1: i32, %arg2: i32) -> (i32, i32) {
    %c0_i32 = arith.constant 0 : i32
    return %arg1, %arg2 : i32, i32
  }
  func.func @transform_2(%arg0: i32, %arg1: i32, %arg2: i32) -> (i32, i32) {
    %c0_i32 = arith.constant 0 : i32
    %c0_i32_0 = arith.constant 0 : i32
    return %c0_i32, %arg1 : i32, i32
  }
  func.func @transform_3(%arg0: i32, %arg1: i32, %arg2: i32) -> (i32, i32) {
    %c0_i32 = arith.constant 0 : i32
    %c0_i32_0 = arith.constant 0 : i32
    %c0_i32_1 = arith.constant 0 : i32
    return %c0_i32, %c0_i32_0 : i32, i32
  }
  func.func @transform_4(%arg0: i32, %arg1: i32, %arg2: i32) -> (i32, i32) {
    %c0_i32 = arith.constant 0 : i32
    %c0_i32_0 = arith.constant 0 : i32
    %c0_i32_1 = arith.constant 0 : i32
    return %c0_i32, %c0_i32_0 : i32, i32
  }
  func.func @transform_5(%arg0: i32, %arg1: i32, %arg2: i32) -> (i32, i32) {
    %c0_i32 = arith.constant 0 : i32
    return %arg0, %arg1 : i32, i32
  }
}

module attributes {stable_mosaic.version = 11 : i64} {
  func.func @_linear_kernel(%arg0: i32, %arg1: i32, %arg2: i32, %arg3: memref<16x128xf32, #tpu.memory_space<vmem>>, %arg4: memref<32x128xf32, #tpu.memory_space<vmem>>, %arg5: memref<1x32xf32, #tpu.memory_space<vmem>>, %arg6: memref<16x32xf32, #tpu.memory_space<vmem>>, %arg7: memref<16x32xf32, #tpu.memory_space<vmem>>, %arg8: memref<16x32xf32, #tpu.memory_space<vmem>>) attributes {dimension_semantics = [#tpu.dimension_semantics<parallel>, #tpu.dimension_semantics<parallel>, #tpu.dimension_semantics<arbitrary>], iteration_bounds = array<i64: 1, 1, 1>, scalar_prefetch = 0 : i64, scratch_operands = 1 : i64, tpu.core_type = #tpu.core_type<tc>, window_params = [{transform_indices = @transform_0, window_bounds = array<i64: 16, 128>}, {transform_indices = @transform_1, window_bounds = array<i64: 32, 128>}, {transform_indices = @transform_2, window_bounds = array<i64: 1, 32>}, {transform_indices = @transform_3, window_bounds = array<i64: 16, 32>}, {transform_indices = @transform_4, window_bounds = array<i64: 16, 32>}]} {
    %c0_i32 = arith.constant 0 : i32
    %0 = arith.cmpi eq, %arg2, %c0_i32 : i32
    %1 = arith.extui %0 : i1 to i32
    %c0_i32_0 = arith.constant 0 : i32
    %2 = arith.cmpi ne, %1, %c0_i32_0 : i32
    scf.if %2 {
      %cst_10 = arith.constant 0.000000e+00 : f32
      %14 = vector.broadcast %cst_10 : f32 to vector<16x32xf32>
      %c0_11 = arith.constant 0 : index
      %c0_12 = arith.constant 0 : index
      %15 = vector.load %arg8[%c0_11, %c0_12] : memref<16x32xf32, #tpu.memory_space<vmem>>, vector<16x32xf32>
      tpu.vector_store %arg8[%c0_11, %c0_12], %14 {strides = array<i32>} : memref<16x32xf32, #tpu.memory_space<vmem>>, vector<16x32xf32>,
    } else {
    }
    %c0 = arith.constant 0 : index
    %c0_1 = arith.constant 0 : index
    %3 = vector.load %arg3[%c0, %c0_1] : memref<16x128xf32, #tpu.memory_space<vmem>>, vector<16x128xf32>
    %4 = arith.truncf %3 : vector<16x128xf32> to vector<16x128xbf16>
    %c0_2 = arith.constant 0 : index
    %c0_3 = arith.constant 0 : index
    %5 = vector.load %arg4[%c0_2, %c0_3] : memref<32x128xf32, #tpu.memory_space<vmem>>, vector<32x128xf32>
    %6 = arith.truncf %5 : vector<32x128xf32> to vector<32x128xbf16>
    %c0_4 = arith.constant 0 : index
    %c0_5 = arith.constant 0 : index
    %7 = vector.load %arg8[%c0_4, %c0_5] : memref<16x32xf32, #tpu.memory_space<vmem>>, vector<16x32xf32>
    %cst = arith.constant dense<0.000000e+00> : vector<16x32xf32>
    %8 = tpu.matmul %4, %6, %cst {dimension_numbers = #tpu.dot_dimension_numbers<[1], [1], [0], [0], [0, 0, 1, 0], [], []>} : vector<16x128xbf16>, vector<32x128xbf16>, vector<16x32xf32> -> vector<16x32xf32>
    %9 = arith.addf %7, %8 : vector<16x32xf32>
    %c0_6 = arith.constant 0 : index
    %c0_7 = arith.constant 0 : index
    %10 = vector.load %arg8[%c0_6, %c0_7] : memref<16x32xf32, #tpu.memory_space<vmem>>, vector<16x32xf32>
    tpu.vector_store %arg8[%c0_6, %c0_7], %9 {strides = array<i32>} : memref<16x32xf32, #tpu.memory_space<vmem>>, vector<16x32xf32>,
    %c0_i32_8 = arith.constant 0 : i32
    %11 = arith.cmpi eq, %arg2, %c0_i32_8 : i32
    %12 = arith.extui %11 : i1 to i32
    %c0_i32_9 = arith.constant 0 : i32
    %13 = arith.cmpi ne, %12, %c0_i32_9 : i32
    scf.if %13 {
      %c0_10 = arith.constant 0 : index
      %c0_11 = arith.constant 0 : index
      %14 = vector.load %arg8[%c0_10, %c0_11] : memref<16x32xf32, #tpu.memory_space<vmem>>, vector<16x32xf32>
      %c0_12 = arith.constant 0 : index
      %c0_13 = arith.constant 0 : index
      %15 = vector.load %arg5[%c0_12, %c0_13] : memref<1x32xf32, #tpu.memory_space<vmem>>, vector<1x32xf32>
      %16 = vector.broadcast %15 : vector<1x32xf32> to vector<16x32xf32>
      %17 = arith.addf %14, %16 : vector<16x32xf32>
      %c0_14 = arith.constant 0 : index
      %c0_15 = arith.constant 0 : index
      %18 = vector.load %arg6[%c0_14, %c0_15] : memref<16x32xf32, #tpu.memory_space<vmem>>, vector<16x32xf32>
      %19 = arith.addf %17, %18 : vector<16x32xf32>
      %c0_16 = arith.constant 0 : index
      %c0_17 = arith.constant 0 : index
      %20 = vector.load %arg7[%c0_16, %c0_17] : memref<16x32xf32, #tpu.memory_space<vmem>>, vector<16x32xf32>
      tpu.vector_store %arg7[%c0_16, %c0_17], %19 {strides = array<i32>} : memref<16x32xf32, #tpu.memory_space<vmem>>, vector<16x32xf32>,
    } else {
    }
    return
  }
  func.func @transform_0(%arg0: i32, %arg1: i32, %arg2: i32) -> (i32, i32) {
    %c0_i32 = arith.constant 0 : i32
    return %arg0, %arg2 : i32, i32
  }
  func.func @transform_1(%arg0: i32, %arg1: i32, %arg2: i32) -> (i32, i32) {
    %c0_i32 = arith.constant 0 : i32
    return %arg1, %arg2 : i32, i32
  }
  func.func @transform_2(%arg0: i32, %arg1: i32, %arg2: i32) -> (i32, i32) {
    %c0_i32 = arith.constant 0 : i32
    %c0_i32_0 = arith.constant 0 : i32
    return %c0_i32, %arg1 : i32, i32
  }
  func.func @transform_3(%arg0: i32, %arg1: i32, %arg2: i32) -> (i32, i32) {
    %c0_i32 = arith.constant 0 : i32
    return %arg0, %arg1 : i32, i32
  }
  func.func @transform_4(%arg0: i32, %arg1: i32, %arg2: i32) -> (i32, i32) {
    %c0_i32 = arith.constant 0 : i32
    return %arg0, %arg1 : i32, i32
  }
}

module attributes {stable_mosaic.version = 11 : i64} {
  func.func @_linear_kernel(%arg0: i32, %arg1: i32, %arg2: i32, %arg3: memref<16x128xf32, #tpu.memory_space<vmem>>, %arg4: memref<32x128xf32, #tpu.memory_space<vmem>>, %arg5: memref<1x32xf32, #tpu.memory_space<vmem>>, %arg6: memref<16x32xf32, #tpu.memory_space<vmem>>, %arg7: memref<16x32xf32, #tpu.memory_space<vmem>>, %arg8: memref<16x32xf32, #tpu.memory_space<vmem>>) attributes {dimension_semantics = [#tpu.dimension_semantics<parallel>, #tpu.dimension_semantics<parallel>, #tpu.dimension_semantics<arbitrary>], iteration_bounds = array<i64: 1, 1, 1>, scalar_prefetch = 0 : i64, scratch_operands = 1 : i64, tpu.core_type = #tpu.core_type<tc>, window_params = [{transform_indices = @transform_0, window_bounds = array<i64: 16, 128>}, {transform_indices = @transform_1, window_bounds = array<i64: 32, 128>}, {transform_indices = @transform_2, window_bounds = array<i64: 1, 32>}, {transform_indices = @transform_3, window_bounds = array<i64: 16, 32>}, {transform_indices = @transform_4, window_bounds = array<i64: 16, 32>}]} {
    %c0_i32 = arith.constant 0 : i32
    %0 = arith.cmpi eq, %arg2, %c0_i32 : i32
    %1 = arith.extui %0 : i1 to i32
    %c0_i32_0 = arith.constant 0 : i32
    %2 = arith.cmpi ne, %1, %c0_i32_0 : i32
    scf.if %2 {
      %cst_10 = arith.constant 0.000000e+00 : f32
      %14 = vector.broadcast %cst_10 : f32 to vector<16x32xf32>
      %c0_11 = arith.constant 0 : index
      %c0_12 = arith.constant 0 : index
      %15 = vector.load %arg8[%c0_11, %c0_12] : memref<16x32xf32, #tpu.memory_space<vmem>>, vector<16x32xf32>
      tpu.vector_store %arg8[%c0_11, %c0_12], %14 {strides = array<i32>} : memref<16x32xf32, #tpu.memory_space<vmem>>, vector<16x32xf32>,
    } else {
    }
    %c0 = arith.constant 0 : index
    %c0_1 = arith.constant 0 : index
    %3 = vector.load %arg3[%c0, %c0_1] : memref<16x128xf32, #tpu.memory_space<vmem>>, vector<16x128xf32>
    %4 = arith.truncf %3 : vector<16x128xf32> to vector<16x128xbf16>
    %c0_2 = arith.constant 0 : index
    %c0_3 = arith.constant 0 : index
    %5 = vector.load %arg4[%c0_2, %c0_3] : memref<32x128xf32, #tpu.memory_space<vmem>>, vector<32x128xf32>
    %6 = arith.truncf %5 : vector<32x128xf32> to vector<32x128xbf16>
    %c0_4 = arith.constant 0 : index
    %c0_5 = arith.constant 0 : index
    %7 = vector.load %arg8[%c0_4, %c0_5] : memref<16x32xf32, #tpu.memory_space<vmem>>, vector<16x32xf32>
    %cst = arith.constant dense<0.000000e+00> : vector<16x32xf32>
    %8 = tpu.matmul %4, %6, %cst {dimension_numbers = #tpu.dot_dimension_numbers<[1], [1], [0], [0], [0, 0, 1, 0], [], []>} : vector<16x128xbf16>, vector<32x128xbf16>, vector<16x32xf32> -> vector<16x32xf32>
    %9 = arith.addf %7, %8 : vector<16x32xf32>
    %c0_6 = arith.constant 0 : index
    %c0_7 = arith.constant 0 : index
    %10 = vector.load %arg8[%c0_6, %c0_7] : memref<16x32xf32, #tpu.memory_space<vmem>>, vector<16x32xf32>
    tpu.vector_store %arg8[%c0_6, %c0_7], %9 {strides = array<i32>} : memref<16x32xf32, #tpu.memory_space<vmem>>, vector<16x32xf32>,
    %c0_i32_8 = arith.constant 0 : i32
    %11 = arith.cmpi eq, %arg2, %c0_i32_8 : i32
    %12 = arith.extui %11 : i1 to i32
    %c0_i32_9 = arith.constant 0 : i32
    %13 = arith.cmpi ne, %12, %c0_i32_9 : i32
    scf.if %13 {
      %c0_10 = arith.constant 0 : index
      %c0_11 = arith.constant 0 : index
      %14 = vector.load %arg8[%c0_10, %c0_11] : memref<16x32xf32, #tpu.memory_space<vmem>>, vector<16x32xf32>
      %c0_12 = arith.constant 0 : index
      %c0_13 = arith.constant 0 : index
      %15 = vector.load %arg5[%c0_12, %c0_13] : memref<1x32xf32, #tpu.memory_space<vmem>>, vector<1x32xf32>
      %16 = vector.broadcast %15 : vector<1x32xf32> to vector<16x32xf32>
      %17 = arith.addf %14, %16 : vector<16x32xf32>
      %c0_14 = arith.constant 0 : index
      %c0_15 = arith.constant 0 : index
      %18 = vector.load %arg6[%c0_14, %c0_15] : memref<16x32xf32, #tpu.memory_space<vmem>>, vector<16x32xf32>
      %19 = arith.addf %17, %18 : vector<16x32xf32>
      %c0_16 = arith.constant 0 : index
      %c0_17 = arith.constant 0 : index
      %20 = vector.load %arg7[%c0_16, %c0_17] : memref<16x32xf32, #tpu.memory_space<vmem>>, vector<16x32xf32>
      tpu.vector_store %arg7[%c0_16, %c0_17], %19 {strides = array<i32>} : memref<16x32xf32, #tpu.memory_space<vmem>>, vector<16x32xf32>,
    } else {
    }
    return
  }
  func.func @transform_0(%arg0: i32, %arg1: i32, %arg2: i32) -> (i32, i32) {
    %c0_i32 = arith.constant 0 : i32
    return %arg0, %arg2 : i32, i32
  }
  func.func @transform_1(%arg0: i32, %arg1: i32, %arg2: i32) -> (i32, i32) {
    %c0_i32 = arith.constant 0 : i32
    return %arg1, %arg2 : i32, i32
  }
  func.func @transform_2(%arg0: i32, %arg1: i32, %arg2: i32) -> (i32, i32) {
    %c0_i32 = arith.constant 0 : i32
    %c0_i32_0 = arith.constant 0 : i32
    return %c0_i32, %arg1 : i32, i32
  }
  func.func @transform_3(%arg0: i32, %arg1: i32, %arg2: i32) -> (i32, i32) {
    %c0_i32 = arith.constant 0 : i32
    return %arg0, %arg1 : i32, i32
  }
  func.func @transform_4(%arg0: i32, %arg1: i32, %arg2: i32) -> (i32, i32) {
    %c0_i32 = arith.constant 0 : i32
    return %arg0, %arg1 : i32, i32
  }
}

</mosaic_0001>

<llo_original>
// kernel: custom_transformer_forward.12
$region0: #{custom_transformer_forward.12}
  #allocation0 [shape = 'u32[]', space=smem, size = 0x4, offset = 0x4, fixed_abs, tag = 'smem constant byte address 0x4 - core index']
  #allocation1 [shape = 'u32[72,128]{1,0:T(1,128)}', space=vmem, size = 0x9000, scoped, tag = 'internal scratch']
  #allocation2 [shape = 'f32[16,32]{1,0:T(8,128)}', space=vmem, size = 0x2000, scoped, tag = 'scratch operand']
  %s0 = inlined_call_operand.vmem [shape: f32[16,32], index: 0, kind: input, shape index: {}]
  %s1 = inlined_call_operand.vmem [shape: f32[32,32], index: 1, kind: input, shape index: {}]
  %s2 = inlined_call_operand.vmem [shape: f32[1,32], index: 2, kind: input, shape index: {}]
  %s3 = inlined_call_operand.vmem [shape: f32[16,32], index: 3, kind: input, shape index: {}]
  %s4 = inlined_call_operand.vmem [shape: f32[16,32], index: 4, kind: output, shape index: {}]
  %s5 = sld [smem:[#allocation0]]
  $region34: #{custom_transformer_forward.12} parent=0
    _
  %s7 = ssub.s32 1, %s5
  %s8 = scalar_select 0, %s7, %s5
  // Predicated region
  $region2: #{custom_transformer_forward.12} parent=0 // pred_check
    _
  $region3: #{custom_transformer_forward.12} parent=0 // pred_check_branch
    %10 = sbr.rel (0) target = $region5
  $region4: #{custom_transformer_forward.12} parent=0 // pred_region
    _
  $region5: #{custom_transformer_forward.12} parent=0 // pred_fallthru
    _
  // Predicated region
  $region6: #{custom_transformer_forward.12} parent=0 // pred_check
    _
  $region7: #{custom_transformer_forward.12} parent=0 // pred_check_branch
    %12 = sbr.rel (0) target = $region9
  $region8: #{custom_transformer_forward.12} parent=0 // pred_region
    _
  $region9: #{custom_transformer_forward.12} parent=0 // pred_fallthru
    _
  // Predicated region
  $region10: #{custom_transformer_forward.12} parent=0 // pred_check
    _
  $region11: #{custom_transformer_forward.12} parent=0 // pred_check_branch
    %14 = sbr.rel (0) target = $region13
  $region12: #{custom_transformer_forward.12} parent=0 // pred_region
    _
  $region13: #{custom_transformer_forward.12} parent=0 // pred_fallthru
    _
  // Predicated region
  $region14: #{custom_transformer_forward.12} parent=0 // pred_check
    _
  $region15: #{custom_transformer_forward.12} parent=0 // pred_check_branch
    %16 = sbr.rel (0) target = $region17
  $region16: #{custom_transformer_forward.12} parent=0 // pred_region
    _
  $region17: #{custom_transformer_forward.12} parent=0 // pred_fallthru
    _
  %p18 = scmp.eq.s32.totalorder 0, 0
  // Predicated region
  $region18: #{custom_transformer_forward.12} parent=0 // pred_check
    %p19 = pneg %p18
  $region19: #{custom_transformer_forward.12} parent=0 // pred_check_branch
    %21 = sbr.rel (%p19) target = $region21
  $region20: #{custom_transformer_forward.12} parent=0 // pred_region
    %vm22 = vcmask 261120
    %23 = vst.msk [vmem:[#allocation2] sm:$0xff] %vm22, 0.0
    %24 = vst.msk [vmem:[#allocation2 + $0x8] sm:$0xff] %vm22, 0.0
  $region21: #{custom_transformer_forward.12} parent=0 // pred_fallthru
    _
  %v25 = vld [vmem:[%s0] sm:$0xff]
  %v26 = vld [vmem:[%s0 + $0x8] sm:$0xff]
  %v27 = vpack.c.bf16 %v26, %v25
  %v28 = vld [vmem:[%s1] sm:$0xff]
  %v29 = vld [vmem:[%s1 + $0x8] sm:$0xff]
  %v30 = vld [vmem:[%s1 + $0x10] sm:$0xff]
  %v31 = vld [vmem:[%s1 + $0x18] sm:$0xff]
  %v32 = vpack.c.bf16 %v29, %v28
  %v33 = vpack.c.bf16 %v31, %v30
  %v34 = vld [vmem:[#allocation2] sm:$0xff]
  %v35 = vld [vmem:[#allocation2 + $0x8] sm:$0xff]
  %vm36 = vcmask 261120
  %v38 = vsel %vm36, %v27, 0
  %v41 = vsel %vm36, %v32, 0
  %v44 = vsel %vm36, %v33, 0
  %46 = vmatpush.bf16.xpose.msra.mxu0 0
  %47 = vmatpush.bf16.xpose.msra.mxu0 0
  %48 = vmatpush.bf16.xpose.msra.mxu0 0
  %49 = vmatpush.bf16.xpose.msra.mxu0 0
  %50 = vmatpush.bf16.xpose.msra.mxu0 0
  %51 = vmatpush.bf16.xpose.msra.mxu0 0
  %52 = vmatpush.bf16.xpose.msra.mxu0 %v44
  %53 = vmatpush.bf16.xpose.msra.mxu0 %v41
  %54 = vmatmul.bf16.gmra.mxu0 %v38
  %v55 = vpop.f32.mrf.mxu0
  %v56 = vadd.f32 0.0, %v55
  %v57 = vpop.f32.mrf.mxu0
  %v58 = vadd.f32 0.0, %v57
  %59 = vdwg.mxu0
  %v60 = vadd.f32 %v34, %v56
  %v61 = vadd.f32 %v35, %v58
  %62 = vst.msk [vmem:[#allocation2] sm:$0xff] %vm36, %v60
  %63 = vst.msk [vmem:[#allocation2 + $0x8] sm:$0xff] %vm36, %v61
  // Predicated region
  $region22: #{custom_transformer_forward.12} parent=0 // pred_check
    %p64 = pneg %p18
  $region23: #{custom_transformer_forward.12} parent=0 // pred_check_branch
    %66 = sbr.rel (%p64) target = $region25
  $region24: #{custom_transformer_forward.12} parent=0 // pred_region
    %v67 = vld [vmem:[#allocation2] sm:$0xff]
    %v68 = vld [vmem:[#allocation2 + $0x8] sm:$0xff]
    %v69 = vld [vmem:[%s2] sm:$0x1]
    %v71 = vperm.slane %v69, 0
    %v73 = vadd.f32 %v67, %v71
    %v74 = vadd.f32 %v68, %v71
    %v75 = vld [vmem:[%s3] sm:$0xff]
    %v76 = vld [vmem:[%s3 + $0x8] sm:$0xff]
    %v77 = vadd.f32 %v73, %v75
    %v78 = vadd.f32 %v74, %v76
    %79 = vst.msk [vmem:[%s4] sm:$0xff] %vm36, %v77
    %80 = vst.msk [vmem:[%s4 + $0x8] sm:$0xff] %vm36, %v78
  $region25: #{custom_transformer_forward.12} parent=0 // pred_fallthru
    _
  // Predicated region
  $region26: #{custom_transformer_forward.12} parent=0 // pred_check
    _
  $region27: #{custom_transformer_forward.12} parent=0 // pred_check_branch
    %82 = sbr.rel (0) target = $region29
  $region28: #{custom_transformer_forward.12} parent=0 // pred_region
    _
  $region29: #{custom_transformer_forward.12} parent=0 // pred_fallthru
    _
  // Predicated region
  $region30: #{custom_transformer_forward.12} parent=0 // pred_check
    _
  $region31: #{custom_transformer_forward.12} parent=0 // pred_check_branch
    %84 = sbr.rel (0) target = $region33
  $region32: #{custom_transformer_forward.12} parent=0 // pred_region
    _
  $region33: #{custom_transformer_forward.12} parent=0 // pred_fallthru
    _

// kernel: custom_transformer_forward.11
$region0: #{custom_transformer_forward.11}
  #allocation0 [shape = 'u32[]', space=smem, size = 0x4, offset = 0x4, fixed_abs, tag = 'smem constant byte address 0x4 - core index']
  #allocation1 [shape = 'u32[72,128]{1,0:T(1,128)}', space=vmem, size = 0x9000, scoped, tag = 'internal scratch']
  %s0 = inlined_call_operand.vmem [shape: f32[2,8,96], index: 0, kind: input, shape index: {}]
  %s1 = inlined_call_operand.vmem [shape: f32[2,8,32], index: 1, kind: output, shape index: {}]
  %s2 = sld [smem:[#allocation0]]
  $region37: #{custom_transformer_forward.11} parent=0
    _
  %s4 = ssub.s32 1, %s2
  %s5 = scalar_select 0, %s4, %s2
  loop: start=0, step=1, limit=4
  $region2: #{custom_transformer_forward.11} parent=0 // loop_pre_header
    _
  $region3: #{custom_transformer_forward.11} parent=0 // loop_header
    %s7 = sphi 0, %s11
    %p8 = scmp.ge.s32.totalorder %s7, 4
    %s17 = sphi 0, %s19
    %s20 = sphi 0, %s17
    %s21 = sphi 0, %s20
    %s37 = sphi 0, %s21
    %s43 = sphi 0, %s45
    %s46 = sphi 0, %s43
    %s47 = sphi 0, %s46
    %s63 = sphi 0, %s47
  $region4: #{custom_transformer_forward.11} parent=0 // loop_header_branch
    %10 = sbr.rel (%p8) target = $region8
  $region5: #{custom_transformer_forward.11} parent=0 // loop_body
    %s12 = ssub.s32 %s7, 1
    %s13 = ssub.s32 %s7, 2
    %s14 = sadd.s32 %s7, 1
    %s15 = ssub.s32 %s7, %s14
    %p16 = scmp.eq.s32.totalorder %s15, 0
    %s18 = sadd.s32 %s17, 1
    %s19 = scalar_select %p16, %s17, %s18
    %p22 = pneg %p16
    %p23 = scmp.eq.s32.totalorder %s7, 1
    %p24 = por %p22, %p23
    %p25 = scmp.ne.s32.totalorder %s17, %s20
    %p26 = scmp.eq.s32.totalorder %s7, 0
    %p27 = por %p25, %p26
    %p28 = scmp.ne.s32.totalorder %s17, %s20
    %p29 = scmp.eq.s32.totalorder %s12, 1
    %p30 = por %p28, %p29
    %p31 = scmp.ne.s32.totalorder %s20, %s21
    %p32 = scmp.eq.s32.totalorder %s12, 0
    %p33 = por %p31, %p32
    %p34 = scmp.ne.s32.totalorder %s20, %s21
    %p35 = scmp.eq.s32.totalorder %s13, 1
    %p36 = por %p34, %p35
    %p38 = scmp.ne.s32.totalorder %s21, %s37
    %p39 = scmp.eq.s32.totalorder %s13, 0
    %p40 = por %p38, %p39
    %s41 = ssub.s32 %s7, %s14
    %p42 = scmp.eq.s32.totalorder %s41, 0
    %s44 = sadd.s32 %s43, 1
    %s45 = scalar_select %p42, %s43, %s44
    %p48 = pneg %p42
    %p49 = scmp.eq.s32.totalorder %s7, 1
    %p50 = por %p48, %p49
    %p51 = scmp.ne.s32.totalorder %s43, %s46
    %p52 = scmp.eq.s32.totalorder %s7, 0
    %p53 = por %p51, %p52
    %p54 = scmp.ne.s32.totalorder %s43, %s46
    %p55 = scmp.eq.s32.totalorder %s12, 1
    %p56 = por %p54, %p55
    %p57 = scmp.ne.s32.totalorder %s46, %s47
    %p58 = scmp.eq.s32.totalorder %s12, 0
    %p59 = por %p57, %p58
    %p60 = scmp.ne.s32.totalorder %s46, %s47
    %p61 = scmp.eq.s32.totalorder %s13, 1
    %p62 = por %p60, %p61
    %p64 = scmp.ne.s32.totalorder %s47, %s63
    %p65 = scmp.eq.s32.totalorder %s13, 0
    %p66 = por %p64, %p65
    %p67 = scmp.le.s32.totalorder 1, %s7
    %p68 = scmp.lt.s32.totalorder %s7, 3
    %p69 = pnand %p67, %p68
    %p70 = pneg %p69
    // Predicated region
    $region9: #{custom_transformer_forward.11} parent=5 // pred_check
      _
    $region10: #{custom_transformer_forward.11} parent=5 // pred_check_branch
      %72 = sbr.rel (%p69) target = $region12
    $region11: #{custom_transformer_forward.11} parent=5 // pred_region
      %s73 = ssub.s32 %s7, 1
    $region12: #{custom_transformer_forward.11} parent=5 // pred_fallthru
      _
    %p74 = scmp.lt.s32.totalorder %s7, 2
    // Predicated region
    $region13: #{custom_transformer_forward.11} parent=5 // pred_check
      %p75 = pneg %p74
    $region14: #{custom_transformer_forward.11} parent=5 // pred_check_branch
      %77 = sbr.rel (%p75) target = $region16
    $region15: #{custom_transformer_forward.11} parent=5 // pred_region
      // Predicated region
      $region17: #{custom_transformer_forward.11} parent=15 // pred_check
        %p78 = pneg %p27
      $region18: #{custom_transformer_forward.11} parent=15 // pred_check_branch
        %80 = sbr.rel (%p78) target = $region20
      $region19: #{custom_transformer_forward.11} parent=15 // pred_region
        %p81 = scmp.lt.s32.totalorder %s7, 1
        %s82 = scalar_select %p81, %s7, 1
        %s83 = smul.addr %s82, 8
        %s84 = scalar_lea.vmem %s0, %s83
      $region20: #{custom_transformer_forward.11} parent=15 // pred_fallthru
        _
    $region16: #{custom_transformer_forward.11} parent=5 // pred_fallthru
      _
    %p85 = scmp.le.s32.totalorder 1, %s7
    %p86 = scmp.lt.s32.totalorder %s7, 3
    %p87 = pnand %p85, %p86
    %p88 = pneg %p87
    // Predicated region
    $region21: #{custom_transformer_forward.11} parent=5 // pred_check
      _
    $region22: #{custom_transformer_forward.11} parent=5 // pred_check_branch
      %90 = sbr.rel (%p87) target = $region24
    $region23: #{custom_transformer_forward.11} parent=5 // pred_region
      %s91 = ssub.s32 %s7, 1
      %p92 = scmp.lt.s32.totalorder %s12, 1
      %s93 = scalar_select %p92, %s12, 1
      %s94 = smul.addr %s93, 8
      %s95 = scalar_lea.vmem %s0, %s94
      %p96 = pneg %p33
      %p97 = pneg %p30
      %p98 = pneg %p59
      %p99 = pneg %p56
      %p100 = scmp.lt.s32.totalorder %s12, 1
      %s101 = scalar_select %p100, %s12, 1
      %s102 = smul.addr %s101, 8
      %s103 = scalar_lea.vmem %s1, %s102
      %p104 = scmp.lt.s32.totalorder %s12, 1
      %s105 = scalar_select %p104, %s12, 1
      %s106 = smul.addr %s105, 8
      %s107 = scalar_lea.vmem %s0, %s106
      %p108 = scmp.lt.s32.totalorder %s12, 1
      %s109 = scalar_select %p108, %s12, 1
      %s110 = smul.addr %s109, 8
      %s111 = scalar_lea.vmem %s1, %s110
      %v113 = vld [vmem:[%s107] sm:$0xff]
      %v114 = vmul.f32 %v113, 0.35355338
      %v115 = vpack.c.bf16 %v114, %v114
      %v116 = vpack.c.bf16 %v113, %v113
      %118 = vrot.lane.b32.xlu0 %v116, 96
      %v119 = vpop.permute.xlu0 %118
      %vm120 = vcmask 64512
      %v122 = vsel %vm120, %v115, 0
      %v125 = vsel %vm120, %v119, 0
      %127 = vmatpush.bf16.xpose.msra.mxu0 0
      %128 = vmatpush.bf16.xpose.msra.mxu0 0
      %129 = vmatpush.bf16.xpose.msra.mxu0 0
      %130 = vmatpush.bf16.xpose.msra.mxu0 0
      %131 = vmatpush.bf16.xpose.msra.mxu0 0
      %132 = vmatpush.bf16.xpose.msra.mxu0 0
      %133 = vmatpush.bf16.xpose.msra.mxu0 0
      %134 = vmatpush.bf16.xpose.msra.mxu0 %v125
      %135 = vmatmul.bf16.gmra.mxu0 %v122
      %v136 = vpop.f32.mrf.mxu0
      %v137 = vadd.f32 0.0, %v136
      %v138 = vpop.f32.mrf.mxu0
      %139 = vdwg.mxu0
      %v140 = vsel %vm120, %v137, -inf
      %141 = vmax.xlane.f32.xlu0 %v140
      %v142 = vpop.xlane.xlu0 %141
      %v143 = vsub.f32 %v137, %v142
      %v144 = vmul.f32 %v143, 1.442695
      %v145 = vpow.pop %v144
      %v146 = vsel %vm120, %v145, 0.0
      %147 = vadd.xlane.f32.xlu0 %v146
      %v148 = vpop.xlane.xlu0 %147
      %v149 = vpack.c.bf16 %v145, %v145
      %150 = vrot.lane.b32.xlu0 %v116, 64
      %v151 = vpop.permute.xlu0 %150
      %v153 = vsel %vm120, %v149, 0
      %vm155 = vcmask 1043456
      %v157 = vsel %vm155, %v151, 0
      %159 = vmatpush.bf16.msra.mxu0 0
      %160 = vmatpush.bf16.msra.mxu0 0
      %161 = vmatpush.bf16.msra.mxu0 0
      %162 = vmatpush.bf16.msra.mxu0 0
      %163 = vmatpush.bf16.msra.mxu0 0
      %164 = vmatpush.bf16.msra.mxu0 0
      %165 = vmatpush.bf16.msra.mxu0 0
      %166 = vmatpush.bf16.msra.mxu0 %v157
      %167 = vmatmul.bf16.gmra.mxu0 %v153
      %v168 = vpop.f32.mrf.mxu0
      %v169 = vadd.f32 0.0, %v168
      %v170 = vpop.f32.mrf.mxu0
      %171 = vdwg.mxu0
      %v172 = vrcp.pop %v148
      %v173 = vmul.f32 %v169, %v172
      %175 = vrot.lane.b32.xlu0 %v115, 120
      %v176 = vpop.permute.xlu0 %175
      %177 = vrot.lane.b32.xlu0 %v116, 88
      %v178 = vpop.permute.xlu0 %177
      %v180 = vsel %vm120, %v176, 0
      %v183 = vsel %vm120, %v178, 0
      %185 = vmatpush.bf16.xpose.msra.mxu0 0
      %186 = vmatpush.bf16.xpose.msra.mxu0 0
      %187 = vmatpush.bf16.xpose.msra.mxu0 0
      %188 = vmatpush.bf16.xpose.msra.mxu0 0
      %189 = vmatpush.bf16.xpose.msra.mxu0 0
      %190 = vmatpush.bf16.xpose.msra.mxu0 0
      %191 = vmatpush.bf16.xpose.msra.mxu0 0
      %192 = vmatpush.bf16.xpose.msra.mxu0 %v183
      %193 = vmatmul.bf16.gmra.mxu0 %v180
      %v194 = vpop.f32.mrf.mxu0
      %v195 = vadd.f32 0.0, %v194
      %v196 = vpop.f32.mrf.mxu0
      %197 = vdwg.mxu0
      %v198 = vsel %vm120, %v195, -inf
      %199 = vmax.xlane.f32.xlu0 %v198
      %v200 = vpop.xlane.xlu0 %199
      %v201 = vsub.f32 %v195, %v200
      %v202 = vmul.f32 %v201, 1.442695
      %v203 = vpow.pop %v202
      %v204 = vsel %vm120, %v203, 0.0
      %205 = vadd.xlane.f32.xlu0 %v204
      %v206 = vpop.xlane.xlu0 %205
      %v207 = vpack.c.bf16 %v203, %v203
      %208 = vrot.lane.b32.xlu0 %v116, 56
      %v209 = vpop.permute.xlu0 %208
      %v211 = vsel %vm120, %v207, 0
      %v214 = vsel %vm155, %v209, 0
      %216 = vmatpush.bf16.msra.mxu0 0
      %217 = vmatpush.bf16.msra.mxu0 0
      %218 = vmatpush.bf16.msra.mxu0 0
      %219 = vmatpush.bf16.msra.mxu0 0
      %220 = vmatpush.bf16.msra.mxu0 0
      %221 = vmatpush.bf16.msra.mxu0 0
      %222 = vmatpush.bf16.msra.mxu0 0
      %223 = vmatpush.bf16.msra.mxu0 %v214
      %224 = vmatmul.bf16.gmra.mxu0 %v211
      %v225 = vpop.f32.mrf.mxu0
      %v226 = vadd.f32 0.0, %v225
      %v227 = vpop.f32.mrf.mxu0
      %228 = vdwg.mxu0
      %v229 = vrcp.pop %v206
      %v230 = vmul.f32 %v226, %v229
      %231 = vrot.lane.b32.xlu0 %v115, 112
      %v232 = vpop.permute.xlu0 %231
      %233 = vrot.lane.b32.xlu0 %v116, 80
      %v234 = vpop.permute.xlu0 %233
      %v236 = vsel %vm120, %v232, 0
      %v239 = vsel %vm120, %v234, 0
      %241 = vmatpush.bf16.xpose.msra.mxu0 0
      %242 = vmatpush.bf16.xpose.msra.mxu0 0
      %243 = vmatpush.bf16.xpose.msra.mxu0 0
      %244 = vmatpush.bf16.xpose.msra.mxu0 0
      %245 = vmatpush.bf16.xpose.msra.mxu0 0
      %246 = vmatpush.bf16.xpose.msra.mxu0 0
      %247 = vmatpush.bf16.xpose.msra.mxu0 0
      %248 = vmatpush.bf16.xpose.msra.mxu0 %v239
      %249 = vmatmul.bf16.gmra.mxu0 %v236
      %v250 = vpop.f32.mrf.mxu0
      %v251 = vadd.f32 0.0, %v250
      %v252 = vpop.f32.mrf.mxu0
      %253 = vdwg.mxu0
      %v254 = vsel %vm120, %v251, -inf
      %255 = vmax.xlane.f32.xlu0 %v254
      %v256 = vpop.xlane.xlu0 %255
      %v257 = vsub.f32 %v251, %v256
      %v258 = vmul.f32 %v257, 1.442695
      %v259 = vpow.pop %v258
      %v260 = vsel %vm120, %v259, 0.0
      %261 = vadd.xlane.f32.xlu0 %v260
      %v262 = vpop.xlane.xlu0 %261
      %v263 = vpack.c.bf16 %v259, %v259
      %264 = vrot.lane.b32.xlu0 %v116, 48
      %v265 = vpop.permute.xlu0 %264
      %v267 = vsel %vm120, %v263, 0
      %v270 = vsel %vm155, %v265, 0
      %272 = vmatpush.bf16.msra.mxu0 0
      %273 = vmatpush.bf16.msra.mxu0 0
      %274 = vmatpush.bf16.msra.mxu0 0
      %275 = vmatpush.bf16.msra.mxu0 0
      %276 = vmatpush.bf16.msra.mxu0 0
      %277 = vmatpush.bf16.msra.mxu0 0
      %278 = vmatpush.bf16.msra.mxu0 0
      %279 = vmatpush.bf16.msra.mxu0 %v270
      %280 = vmatmul.bf16.gmra.mxu0 %v267
      %v281 = vpop.f32.mrf.mxu0
      %v282 = vadd.f32 0.0, %v281
      %v283 = vpop.f32.mrf.mxu0
      %284 = vdwg.mxu0
      %v285 = vrcp.pop %v262
      %v286 = vmul.f32 %v282, %v285
      %287 = vrot.lane.b32.xlu0 %v115, 104
      %v288 = vpop.permute.xlu0 %287
      %289 = vrot.lane.b32.xlu0 %v116, 72
      %v290 = vpop.permute.xlu0 %289
      %v292 = vsel %vm120, %v288, 0
      %v295 = vsel %vm120, %v290, 0
      %297 = vmatpush.bf16.xpose.msra.mxu0 0
      %298 = vmatpush.bf16.xpose.msra.mxu0 0
      %299 = vmatpush.bf16.xpose.msra.mxu0 0
      %300 = vmatpush.bf16.xpose.msra.mxu0 0
      %301 = vmatpush.bf16.xpose.msra.mxu0 0
      %302 = vmatpush.bf16.xpose.msra.mxu0 0
      %303 = vmatpush.bf16.xpose.msra.mxu0 0
      %304 = vmatpush.bf16.xpose.msra.mxu0 %v295
      %305 = vmatmul.bf16.gmra.mxu0 %v292
      %v306 = vpop.f32.mrf.mxu0
      %v307 = vadd.f32 0.0, %v306
      %v308 = vpop.f32.mrf.mxu0
      %309 = vdwg.mxu0
      %v310 = vsel %vm120, %v307, -inf
      %311 = vmax.xlane.f32.xlu0 %v310
      %v312 = vpop.xlane.xlu0 %311
      %v313 = vsub.f32 %v307, %v312
      %v314 = vmul.f32 %v313, 1.442695
      %v315 = vpow.pop %v314
      %v316 = vsel %vm120, %v315, 0.0
      %317 = vadd.xlane.f32.xlu0 %v316
      %v318 = vpop.xlane.xlu0 %317
      %v319 = vpack.c.bf16 %v315, %v315
      %320 = vrot.lane.b32.xlu0 %v116, 40
      %v321 = vpop.permute.xlu0 %320
      %v323 = vsel %vm120, %v319, 0
      %v326 = vsel %vm155, %v321, 0
      %328 = vmatpush.bf16.msra.mxu0 0
      %329 = vmatpush.bf16.msra.mxu0 0
      %330 = vmatpush.bf16.msra.mxu0 0
      %331 = vmatpush.bf16.msra.mxu0 0
      %332 = vmatpush.bf16.msra.mxu0 0
      %333 = vmatpush.bf16.msra.mxu0 0
      %334 = vmatpush.bf16.msra.mxu0 0
      %335 = vmatpush.bf16.msra.mxu0 %v326
      %336 = vmatmul.bf16.gmra.mxu0 %v323
      %v337 = vpop.f32.mrf.mxu0
      %v338 = vadd.f32 0.0, %v337
      %v339 = vpop.f32.mrf.mxu0
      %340 = vdwg.mxu0
      %v341 = vrcp.pop %v318
      %v342 = vmul.f32 %v338, %v341
      %344 = vrot.lane.b32.xlu0 %v230, 8
      %v345 = vpop.permute.xlu0 %344
      %348 = vrot.lane.b32.xlu0 %v286, 16
      %v349 = vpop.permute.xlu0 %348
      %352 = vrot.lane.b32.xlu0 %v342, 24
      %v353 = vpop.permute.xlu0 %352
      %v355 = vsel %vm120, %v173, %v345
      %vm356 = vcmask 130048
      %v357 = vsel %vm356, %v355, %v349
      %vm358 = vcmask 195584
      %v359 = vsel %vm358, %v357, %v353
      %vm360 = vcmask 261120
      %361 = vst.msk [vmem:[%s111] sm:$0xff] %vm360, %v359
      %p362 = scmp.lt.s32.totalorder %s12, 1
      %s363 = scalar_select %p362, %s12, 1
      %s364 = smul.addr %s363, 8
      %s365 = scalar_lea.vmem %s1, %s364
      // Predicated region
      $region25: #{custom_transformer_forward.11} parent=23 // pred_check
        %p366 = pneg %p56
      $region26: #{custom_transformer_forward.11} parent=23 // pred_check_branch
        %368 = sbr.rel (%p366) target = $region28
      $region27: #{custom_transformer_forward.11} parent=23 // pred_region
        _
      $region28: #{custom_transformer_forward.11} parent=23 // pred_fallthru
        _
    $region24: #{custom_transformer_forward.11} parent=5 // pred_fallthru
      _
    %p369 = scmp.le.s32.totalorder 2, %s7
    // Predicated region
    $region29: #{custom_transformer_forward.11} parent=5 // pred_check
      %p370 = pneg %p369
    $region30: #{custom_transformer_forward.11} parent=5 // pred_check_branch
      %372 = sbr.rel (%p370) target = $region32
    $region31: #{custom_transformer_forward.11} parent=5 // pred_region
      %s373 = ssub.s32 %s7, 2
      // Predicated region
      $region33: #{custom_transformer_forward.11} parent=31 // pred_check
        %p374 = pneg %p62
      $region34: #{custom_transformer_forward.11} parent=31 // pred_check_branch
        %376 = sbr.rel (%p374) target = $region36
      $region35: #{custom_transformer_forward.11} parent=31 // pred_region
        %p377 = scmp.lt.s32.totalorder %s13, 1
        %s378 = scalar_select %p377, %s13, 1
        %s379 = smul.addr %s378, 8
        %s380 = scalar_lea.vmem %s1, %s379
      $region36: #{custom_transformer_forward.11} parent=31 // pred_fallthru
        _
    $region32: #{custom_transformer_forward.11} parent=5 // pred_fallthru
      _
  $region6: #{custom_transformer_forward.11} parent=0 // loop_footer
    %s11 = sadd.s32 1, %s7
  $region7: #{custom_transformer_forward.11} parent=0 // loop_footer_branch
    %6 = sbr.rel target = $region3
  $region8: #{custom_transformer_forward.11} parent=0 // loop_exit
    _

// kernel: custom_transformer_forward.10
$region0: #{custom_transformer_forward.10}
  #allocation0 [shape = 'u32[]', space=smem, size = 0x4, offset = 0x4, fixed_abs, tag = 'smem constant byte address 0x4 - core index']
  #allocation1 [shape = 'u32[72,128]{1,0:T(1,128)}', space=vmem, size = 0x9000, scoped, tag = 'internal scratch']
  #allocation2 [shape = 'f32[16,96]{1,0:T(8,128)}', space=vmem, size = 0x2000, scoped, tag = 'scratch operand']
  %s0 = inlined_call_operand.vmem [shape: f32[16,32], index: 0, kind: input, shape index: {}]
  %s1 = inlined_call_operand.vmem [shape: f32[96,32], index: 1, kind: input, shape index: {}]
  %s2 = inlined_call_operand.vmem [shape: f32[1,96], index: 2, kind: input, shape index: {}]
  %s3 = inlined_call_operand.vmem [shape: f32[1,32], index: 3, kind: input, shape index: {}]
  %s4 = inlined_call_operand.vmem [shape: f32[1,32], index: 4, kind: input, shape index: {}]
  %s5 = inlined_call_operand.vmem [shape: f32[16,96], index: 5, kind: output, shape index: {}]
  %s6 = sld [smem:[#allocation0]]
  $region38: #{custom_transformer_forward.10} parent=0
    _
  %s8 = ssub.s32 1, %s6
  %s9 = scalar_select 0, %s8, %s6
  // Predicated region
  $region2: #{custom_transformer_forward.10} parent=0 // pred_check
    _
  $region3: #{custom_transformer_forward.10} parent=0 // pred_check_branch
    %11 = sbr.rel (0) target = $region5
  $region4: #{custom_transformer_forward.10} parent=0 // pred_region
    _
  $region5: #{custom_transformer_forward.10} parent=0 // pred_fallthru
    _
  // Predicated region
  $region6: #{custom_transformer_forward.10} parent=0 // pred_check
    _
  $region7: #{custom_transformer_forward.10} parent=0 // pred_check_branch
    %13 = sbr.rel (0) target = $region9
  $region8: #{custom_transformer_forward.10} parent=0 // pred_region
    _
  $region9: #{custom_transformer_forward.10} parent=0 // pred_fallthru
    _
  // Predicated region
  $region10: #{custom_transformer_forward.10} parent=0 // pred_check
    _
  $region11: #{custom_transformer_forward.10} parent=0 // pred_check_branch
    %15 = sbr.rel (0) target = $region13
  $region12: #{custom_transformer_forward.10} parent=0 // pred_region
    _
  $region13: #{custom_transformer_forward.10} parent=0 // pred_fallthru
    _
  // Predicated region
  $region14: #{custom_transformer_forward.10} parent=0 // pred_check
    _
  $region15: #{custom_transformer_forward.10} parent=0 // pred_check_branch
    %17 = sbr.rel (0) target = $region17
  $region16: #{custom_transformer_forward.10} parent=0 // pred_region
    _
  $region17: #{custom_transformer_forward.10} parent=0 // pred_fallthru
    _
  // Predicated region
  $region18: #{custom_transformer_forward.10} parent=0 // pred_check
    _
  $region19: #{custom_transformer_forward.10} parent=0 // pred_check_branch
    %19 = sbr.rel (0) target = $region21
  $region20: #{custom_transformer_forward.10} parent=0 // pred_region
    _
  $region21: #{custom_transformer_forward.10} parent=0 // pred_fallthru
    _
  %p21 = scmp.eq.s32.totalorder 0, 0
  // Predicated region
  $region22: #{custom_transformer_forward.10} parent=0 // pred_check
    %p22 = pneg %p21
  $region23: #{custom_transformer_forward.10} parent=0 // pred_check_branch
    %24 = sbr.rel (%p22) target = $region25
  $region24: #{custom_transformer_forward.10} parent=0 // pred_region
    %vm25 = vcmask 785408
    %26 = vst.msk [vmem:[#allocation2] sm:$0xff] %vm25, 0.0
    %27 = vst.msk [vmem:[#allocation2 + $0x8] sm:$0xff] %vm25, 0.0
  $region25: #{custom_transformer_forward.10} parent=0 // pred_fallthru
    _
  %v28 = vld [vmem:[%s0] sm:$0xff]
  %v29 = vld [vmem:[%s0 + $0x8] sm:$0xff]
  %vm30 = vcmask 261120
  %v31 = vsel %vm30, %v28, 0.0
  %32 = vadd.xlane.f32.xlu0 %v31
  %v33 = vpop.xlane.xlu0 %32
  %v34 = vsel %vm30, %v29, 0.0
  %35 = vadd.xlane.f32.xlu0 %v34
  %v36 = vpop.xlane.xlu0 %35
  %v37 = vrcp.pop 32.0
  %v38 = vmul.f32 32.0, %v37
  %v39 = vsub.f32 1.0, %v38
  %v40 = vmul.f32 %v37, %v39
  %v41 = vadd.f32 %v37, %v40
  %vm42 = vweird.f32 %v37
  %v43 = vsel %vm42, %v37, %v41
  %v44 = vmul.f32 %v33, %v43
  %v45 = vmul.f32 %v36, %v43
  %v46 = vsub.f32 %v28, %v44
  %v47 = vsub.f32 %v29, %v45
  %v48 = vmul.f32 %v46, %v46
  %v49 = vmul.f32 %v47, %v47
  %v50 = vsel %vm30, %v48, 0.0
  %51 = vadd.xlane.f32.xlu0 %v50
  %v52 = vpop.xlane.xlu0 %51
  %v53 = vsel %vm30, %v49, 0.0
  %54 = vadd.xlane.f32.xlu0 %v53
  %v55 = vpop.xlane.xlu0 %54
  %v56 = vmul.f32 %v52, %v43
  %v57 = vmul.f32 %v55, %v43
  %v58 = vadd.f32 %v56, 1e-05
  %v59 = vadd.f32 %v57, 1e-05
  %v60 = vrsqrt.pop %v58
  %v61 = vmul.f32 %v60, %v58
  %v62 = vmul.f32 %v61, %v60
  %v63 = vmul.f32 0.5, %v62
  %v64 = vsub.f32 1.5, %v63
  %v65 = vmul.f32 %v60, %v64
  %vm66 = vweird.f32 %v58
  %vm67 = vweird.f32 %v60
  %vm68 = vmor %vm66, %vm67
  %v69 = vsel %vm68, %v60, %v65
  %v70 = vrsqrt.pop %v59
  %v71 = vmul.f32 %v70, %v59
  %v72 = vmul.f32 %v71, %v70
  %v73 = vmul.f32 0.5, %v72
  %v74 = vsub.f32 1.5, %v73
  %v75 = vmul.f32 %v70, %v74
  %vm76 = vweird.f32 %v59
  %vm77 = vweird.f32 %v70
  %vm78 = vmor %vm76, %vm77
  %v79 = vsel %vm78, %v70, %v75
  %v80 = vmul.f32 %v46, %v69
  %v81 = vmul.f32 %v47, %v79
  %v82 = vld [vmem:[%s3] sm:$0x1]
  %v84 = vperm.slane %v82, 0
  %v86 = vmul.f32 %v80, %v84
  %v87 = vmul.f32 %v81, %v84
  %v88 = vld [vmem:[%s4] sm:$0x1]
  %v90 = vperm.slane %v88, 0
  %v92 = vadd.f32 %v86, %v90
  %v93 = vadd.f32 %v87, %v90
  %v94 = vpack.c.bf16 %v93, %v92
  %v95 = vld [vmem:[%s1] sm:$0xff]
  %v96 = vld [vmem:[%s1 + $0x8] sm:$0xff]
  %v97 = vld [vmem:[%s1 + $0x10] sm:$0xff]
  %v98 = vld [vmem:[%s1 + $0x18] sm:$0xff]
  %v99 = vld [vmem:[%s1 + $0x20] sm:$0xff]
  %v100 = vld [vmem:[%s1 + $0x28] sm:$0xff]
  %v101 = vld [vmem:[%s1 + $0x30] sm:$0xff]
  %v102 = vld [vmem:[%s1 + $0x38] sm:$0xff]
  %v103 = vld [vmem:[%s1 + $0x40] sm:$0xff]
  %v104 = vld [vmem:[%s1 + $0x48] sm:$0xff]
  %v105 = vld [vmem:[%s1 + $0x50] sm:$0xff]
  %v106 = vld [vmem:[%s1 + $0x58] sm:$0xff]
  %v107 = vpack.c.bf16 %v96, %v95
  %v108 = vpack.c.bf16 %v98, %v97
  %v109 = vpack.c.bf16 %v100, %v99
  %v110 = vpack.c.bf16 %v102, %v101
  %v111 = vpack.c.bf16 %v104, %v103
  %v112 = vpack.c.bf16 %v106, %v105
  %v113 = vld [vmem:[#allocation2] sm:$0xff]
  %v114 = vld [vmem:[#allocation2 + $0x8] sm:$0xff]
  %v116 = vsel %vm30, %v94, 0
  %v119 = vsel %vm30, %v107, 0
  %v122 = vsel %vm30, %v108, 0
  %v125 = vsel %vm30, %v109, 0
  %v128 = vsel %vm30, %v110, 0
  %v131 = vsel %vm30, %v111, 0
  %v134 = vsel %vm30, %v112, 0
  %136 = vmatpush.bf16.xpose.msra.mxu0 0
  %137 = vmatpush.bf16.xpose.msra.mxu0 0
  %138 = vmatpush.bf16.xpose.msra.mxu0 %v134
  %139 = vmatpush.bf16.xpose.msra.mxu0 %v131
  %140 = vmatpush.bf16.xpose.msra.mxu0 %v128
  %141 = vmatpush.bf16.xpose.msra.mxu0 %v125
  %142 = vmatpush.bf16.xpose.msra.mxu0 %v122
  %143 = vmatpush.bf16.xpose.msra.mxu0 %v119
  %144 = vmatmul.bf16.gmra.mxu0 %v116
  %v145 = vpop.f32.mrf.mxu0
  %v146 = vadd.f32 0.0, %v145
  %v147 = vpop.f32.mrf.mxu0
  %v148 = vadd.f32 0.0, %v147
  %149 = vdwg.mxu0
  %v150 = vadd.f32 %v113, %v146
  %v151 = vadd.f32 %v114, %v148
  %vm152 = vcmask 785408
  %153 = vst.msk [vmem:[#allocation2] sm:$0xff] %vm152, %v150
  %154 = vst.msk [vmem:[#allocation2 + $0x8] sm:$0xff] %vm152, %v151
  // Predicated region
  $region26: #{custom_transformer_forward.10} parent=0 // pred_check
    %p155 = pneg %p21
  $region27: #{custom_transformer_forward.10} parent=0 // pred_check_branch
    %157 = sbr.rel (%p155) target = $region29
  $region28: #{custom_transformer_forward.10} parent=0 // pred_region
    %v158 = vld [vmem:[#allocation2] sm:$0xff]
    %v159 = vld [vmem:[#allocation2 + $0x8] sm:$0xff]
    %v160 = vld [vmem:[%s2] sm:$0x1]
    %v162 = vperm.slane %v160, 0
    %v164 = vadd.f32 %v158, %v162
    %v165 = vadd.f32 %v159, %v162
    %166 = vst.msk [vmem:[%s5] sm:$0xff] %vm152, %v164
    %167 = vst.msk [vmem:[%s5 + $0x8] sm:$0xff] %vm152, %v165
  $region29: #{custom_transformer_forward.10} parent=0 // pred_fallthru
    _
  // Predicated region
  $region30: #{custom_transformer_forward.10} parent=0 // pred_check
    _
  $region31: #{custom_transformer_forward.10} parent=0 // pred_check_branch
    %169 = sbr.rel (0) target = $region33
  $region32: #{custom_transformer_forward.10} parent=0 // pred_region
    _
  $region33: #{custom_transformer_forward.10} parent=0 // pred_fallthru
    _
  // Predicated region
  $region34: #{custom_transformer_forward.10} parent=0 // pred_check
    _
  $region35: #{custom_transformer_forward.10} parent=0 // pred_check_branch
    %171 = sbr.rel (0) target = $region37
  $region36: #{custom_transformer_forward.10} parent=0 // pred_region
    _
  $region37: #{custom_transformer_forward.10} parent=0 // pred_fallthru
    _

// kernel: custom_transformer_forward.13
$region0: #{custom_transformer_forward.13}
  #allocation0 [shape = 'u32[]', space=smem, size = 0x4, offset = 0x4, fixed_abs, tag = 'smem constant byte address 0x4 - core index']
  #allocation1 [shape = 'u32[72,128]{1,0:T(1,128)}', space=vmem, size = 0x9000, scoped, tag = 'internal scratch']
  #allocation2 [shape = 'f32[16,128]{1,0:T(8,128)}', space=vmem, size = 0x2000, scoped, tag = 'scratch operand']
  %s0 = inlined_call_operand.vmem [shape: f32[16,32], index: 0, kind: input, shape index: {}]
  %s1 = inlined_call_operand.vmem [shape: f32[128,32], index: 1, kind: input, shape index: {}]
  %s2 = inlined_call_operand.vmem [shape: f32[1,128], index: 2, kind: input, shape index: {}]
  %s3 = inlined_call_operand.vmem [shape: f32[1,32], index: 3, kind: input, shape index: {}]
  %s4 = inlined_call_operand.vmem [shape: f32[1,32], index: 4, kind: input, shape index: {}]
  %s5 = inlined_call_operand.vmem [shape: f32[16,128], index: 5, kind: output, shape index: {}]
  %s6 = sld [smem:[#allocation0]]
  $region38: #{custom_transformer_forward.13} parent=0
    _
  %s8 = ssub.s32 1, %s6
  %s9 = scalar_select 0, %s8, %s6
  // Predicated region
  $region2: #{custom_transformer_forward.13} parent=0 // pred_check
    _
  $region3: #{custom_transformer_forward.13} parent=0 // pred_check_branch
    %11 = sbr.rel (0) target = $region5
  $region4: #{custom_transformer_forward.13} parent=0 // pred_region
    _
  $region5: #{custom_transformer_forward.13} parent=0 // pred_fallthru
    _
  // Predicated region
  $region6: #{custom_transformer_forward.13} parent=0 // pred_check
    _
  $region7: #{custom_transformer_forward.13} parent=0 // pred_check_branch
    %13 = sbr.rel (0) target = $region9
  $region8: #{custom_transformer_forward.13} parent=0 // pred_region
    _
  $region9: #{custom_transformer_forward.13} parent=0 // pred_fallthru
    _
  // Predicated region
  $region10: #{custom_transformer_forward.13} parent=0 // pred_check
    _
  $region11: #{custom_transformer_forward.13} parent=0 // pred_check_branch
    %15 = sbr.rel (0) target = $region13
  $region12: #{custom_transformer_forward.13} parent=0 // pred_region
    _
  $region13: #{custom_transformer_forward.13} parent=0 // pred_fallthru
    _
  // Predicated region
  $region14: #{custom_transformer_forward.13} parent=0 // pred_check
    _
  $region15: #{custom_transformer_forward.13} parent=0 // pred_check_branch
    %17 = sbr.rel (0) target = $region17
  $region16: #{custom_transformer_forward.13} parent=0 // pred_region
    _
  $region17: #{custom_transformer_forward.13} parent=0 // pred_fallthru
    _
  // Predicated region
  $region18: #{custom_transformer_forward.13} parent=0 // pred_check
    _
  $region19: #{custom_transformer_forward.13} parent=0 // pred_check_branch
    %19 = sbr.rel (0) target = $region21
  $region20: #{custom_transformer_forward.13} parent=0 // pred_region
    _
  $region21: #{custom_transformer_forward.13} parent=0 // pred_fallthru
    _
  %p20 = scmp.eq.s32.totalorder 0, 0
  // Predicated region
  $region22: #{custom_transformer_forward.13} parent=0 // pred_check
    %p21 = pneg %p20
  $region23: #{custom_transformer_forward.13} parent=0 // pred_check_branch
    %23 = sbr.rel (%p21) target = $region25
  $region24: #{custom_transformer_forward.13} parent=0 // pred_region
    %24 = vst [vmem:[#allocation2] sm:$0xff] 0.0
    %25 = vst [vmem:[#allocation2 + $0x8] sm:$0xff] 0.0
  $region25: #{custom_transformer_forward.13} parent=0 // pred_fallthru
    _
  %v26 = vld [vmem:[%s0] sm:$0xff]
  %v27 = vld [vmem:[%s0 + $0x8] sm:$0xff]
  %vm28 = vcmask 261120
  %v29 = vsel %vm28, %v26, 0.0
  %30 = vadd.xlane.f32.xlu0 %v29
  %v31 = vpop.xlane.xlu0 %30
  %v32 = vsel %vm28, %v27, 0.0
  %33 = vadd.xlane.f32.xlu0 %v32
  %v34 = vpop.xlane.xlu0 %33
  %v35 = vrcp.pop 32.0
  %v36 = vmul.f32 32.0, %v35
  %v37 = vsub.f32 1.0, %v36
  %v38 = vmul.f32 %v35, %v37
  %v39 = vadd.f32 %v35, %v38
  %vm40 = vweird.f32 %v35
  %v41 = vsel %vm40, %v35, %v39
  %v42 = vmul.f32 %v31, %v41
  %v43 = vmul.f32 %v34, %v41
  %v44 = vsub.f32 %v26, %v42
  %v45 = vsub.f32 %v27, %v43
  %v46 = vmul.f32 %v44, %v44
  %v47 = vmul.f32 %v45, %v45
  %v48 = vsel %vm28, %v46, 0.0
  %49 = vadd.xlane.f32.xlu0 %v48
  %v50 = vpop.xlane.xlu0 %49
  %v51 = vsel %vm28, %v47, 0.0
  %52 = vadd.xlane.f32.xlu0 %v51
  %v53 = vpop.xlane.xlu0 %52
  %v54 = vmul.f32 %v50, %v41
  %v55 = vmul.f32 %v53, %v41
  %v56 = vadd.f32 %v54, 1e-05
  %v57 = vadd.f32 %v55, 1e-05
  %v58 = vrsqrt.pop %v56
  %v59 = vmul.f32 %v58, %v56
  %v60 = vmul.f32 %v59, %v58
  %v61 = vmul.f32 0.5, %v60
  %v62 = vsub.f32 1.5, %v61
  %v63 = vmul.f32 %v58, %v62
  %vm64 = vweird.f32 %v56
  %vm65 = vweird.f32 %v58
  %vm66 = vmor %vm64, %vm65
  %v67 = vsel %vm66, %v58, %v63
  %v68 = vrsqrt.pop %v57
  %v69 = vmul.f32 %v68, %v57
  %v70 = vmul.f32 %v69, %v68
  %v71 = vmul.f32 0.5, %v70
  %v72 = vsub.f32 1.5, %v71
  %v73 = vmul.f32 %v68, %v72
  %vm74 = vweird.f32 %v57
  %vm75 = vweird.f32 %v68
  %vm76 = vmor %vm74, %vm75
  %v77 = vsel %vm76, %v68, %v73
  %v78 = vmul.f32 %v44, %v67
  %v79 = vmul.f32 %v45, %v77
  %v80 = vld [vmem:[%s3] sm:$0x1]
  %v82 = vperm.slane %v80, 0
  %v84 = vmul.f32 %v78, %v82
  %v85 = vmul.f32 %v79, %v82
  %v86 = vld [vmem:[%s4] sm:$0x1]
  %v88 = vperm.slane %v86, 0
  %v90 = vadd.f32 %v84, %v88
  %v91 = vadd.f32 %v85, %v88
  %v92 = vpack.c.bf16 %v91, %v90
  %v93 = vld [vmem:[%s1] sm:$0xff]
  %v94 = vld [vmem:[%s1 + $0x8] sm:$0xff]
  %v95 = vld [vmem:[%s1 + $0x10] sm:$0xff]
  %v96 = vld [vmem:[%s1 + $0x18] sm:$0xff]
  %v97 = vld [vmem:[%s1 + $0x20] sm:$0xff]
  %v98 = vld [vmem:[%s1 + $0x28] sm:$0xff]
  %v99 = vld [vmem:[%s1 + $0x30] sm:$0xff]
  %v100 = vld [vmem:[%s1 + $0x38] sm:$0xff]
  %v101 = vld [vmem:[%s1 + $0x40] sm:$0xff]
  %v102 = vld [vmem:[%s1 + $0x48] sm:$0xff]
  %v103 = vld [vmem:[%s1 + $0x50] sm:$0xff]
  %v104 = vld [vmem:[%s1 + $0x58] sm:$0xff]
  %v105 = vld [vmem:[%s1 + $0x60] sm:$0xff]
  %v106 = vld [vmem:[%s1 + $0x68] sm:$0xff]
  %v107 = vld [vmem:[%s1 + $0x70] sm:$0xff]
  %v108 = vld [vmem:[%s1 + $0x78] sm:$0xff]
  %v109 = vpack.c.bf16 %v94, %v93
  %v110 = vpack.c.bf16 %v96, %v95
  %v111 = vpack.c.bf16 %v98, %v97
  %v112 = vpack.c.bf16 %v100, %v99
  %v113 = vpack.c.bf16 %v102, %v101
  %v114 = vpack.c.bf16 %v104, %v103
  %v115 = vpack.c.bf16 %v106, %v105
  %v116 = vpack.c.bf16 %v108, %v107
  %v117 = vld [vmem:[#allocation2] sm:$0xff]
  %v118 = vld [vmem:[#allocation2 + $0x8] sm:$0xff]
  %v120 = vsel %vm28, %v92, 0
  %v123 = vsel %vm28, %v109, 0
  %v126 = vsel %vm28, %v110, 0
  %v129 = vsel %vm28, %v111, 0
  %v132 = vsel %vm28, %v112, 0
  %v135 = vsel %vm28, %v113, 0
  %v138 = vsel %vm28, %v114, 0
  %v141 = vsel %vm28, %v115, 0
  %v144 = vsel %vm28, %v116, 0
  %146 = vmatpush.bf16.xpose.msra.mxu0 %v144
  %147 = vmatpush.bf16.xpose.msra.mxu0 %v141
  %148 = vmatpush.bf16.xpose.msra.mxu0 %v138
  %149 = vmatpush.bf16.xpose.msra.mxu0 %v135
  %150 = vmatpush.bf16.xpose.msra.mxu0 %v132
  %151 = vmatpush.bf16.xpose.msra.mxu0 %v129
  %152 = vmatpush.bf16.xpose.msra.mxu0 %v126
  %153 = vmatpush.bf16.xpose.msra.mxu0 %v123
  %154 = vmatmul.bf16.gmra.mxu0 %v120
  %v155 = vpop.f32.mrf.mxu0
  %v156 = vadd.f32 0.0, %v155
  %v157 = vpop.f32.mrf.mxu0
  %v158 = vadd.f32 0.0, %v157
  %159 = vdwg.mxu0
  %v160 = vadd.f32 %v117, %v156
  %v161 = vadd.f32 %v118, %v158
  %162 = vst [vmem:[#allocation2] sm:$0xff] %v160
  %163 = vst [vmem:[#allocation2 + $0x8] sm:$0xff] %v161
  // Predicated region
  $region26: #{custom_transformer_forward.13} parent=0 // pred_check
    %p164 = pneg %p20
  $region27: #{custom_transformer_forward.13} parent=0 // pred_check_branch
    %166 = sbr.rel (%p164) target = $region29
  $region28: #{custom_transformer_forward.13} parent=0 // pred_region
    %v167 = vld [vmem:[#allocation2] sm:$0xff]
    %v168 = vld [vmem:[#allocation2 + $0x8] sm:$0xff]
    %v169 = vld [vmem:[%s2] sm:$0x1]
    %v171 = vperm.slane %v169, 0
    %v173 = vadd.f32 %v167, %v171
    %v174 = vadd.f32 %v168, %v171
    %v175 = vmul.f32 %v173, 0.5
    %v176 = vmul.f32 %v174, 0.5
    %v177 = vmul.f32 %v173, 0.70710677
    %v178 = vmul.f32 %v174, 0.70710677
    %v179 = vand.u32 2147483647, %v177
    %v180 = vand.u32 2147483647, %v178
    %v181 = vmul.f32 %v179, 0.3275911
    %v182 = vmul.f32 %v180, 0.3275911
    %v183 = vadd.f32 %v181, 1.0
    %v184 = vadd.f32 %v182, 1.0
    %v185 = vrcp.pop %v183
    %v186 = vmul.f32 %v183, %v185
    %v187 = vsub.f32 1.0, %v186
    %v188 = vmul.f32 %v185, %v187
    %v189 = vadd.f32 %v185, %v188
    %vm190 = vweird.f32 %v183
    %vm191 = vweird.f32 %v185
    %vm192 = vmor %vm190, %vm191
    %v193 = vsel %vm192, %v185, %v189
    %v194 = vand.u32 2147483647, %v183
    %vm195 = vcmp.eq.f32.partialorder %v194, 8.507059e+37
    %v196 = vand.u32 %v183, 2147483648
    %v197 = vor.u32 1.1754944e-38, %v196
    %v198 = vsel %vm195, %v197, %v193
    %v199 = vmul.f32 1.0, %v198
    %v200 = vrcp.pop %v184
    %v201 = vmul.f32 %v184, %v200
    %v202 = vsub.f32 1.0, %v201
    %v203 = vmul.f32 %v200, %v202
    %v204 = vadd.f32 %v200, %v203
    %vm205 = vweird.f32 %v184
    %vm206 = vweird.f32 %v200
    %vm207 = vmor %vm205, %vm206
    %v208 = vsel %vm207, %v200, %v204
    %v209 = vand.u32 2147483647, %v184
    %vm210 = vcmp.eq.f32.partialorder %v209, 8.507059e+37
    %v211 = vand.u32 %v184, 2147483648
    %v212 = vor.u32 1.1754944e-38, %v211
    %v213 = vsel %vm210, %v212, %v208
    %v214 = vmul.f32 1.0, %v213
    %v215 = vmul.f32 %v199, 1.0614054
    %v216 = vmul.f32 %v214, 1.0614054
    %v217 = vadd.f32 %v215, -1.4531521
    %v218 = vadd.f32 %v216, -1.4531521
    %v219 = vmul.f32 %v217, %v199
    %v220 = vmul.f32 %v218, %v214
    %v221 = vadd.f32 %v219, 1.4214138
    %v222 = vadd.f32 %v220, 1.4214138
    %v223 = vmul.f32 %v221, %v199
    %v224 = vmul.f32 %v222, %v214
    %v225 = vadd.f32 %v223, -0.28449672
    %v226 = vadd.f32 %v224, -0.28449672
    %v227 = vmul.f32 %v225, %v199
    %v228 = vmul.f32 %v226, %v214
    %v229 = vadd.f32 %v227, 0.2548296
    %v230 = vadd.f32 %v228, 0.2548296
    %v231 = vmul.f32 %v229, %v199
    %v232 = vmul.f32 %v230, %v214
    %v233 = vsub.f32 0.0, %v179
    %v234 = vsub.f32 0.0, %v180
    %v235 = vmul.f32 %v233, %v179
    %v236 = vmul.f32 %v234, %v180
    %v237 = vmul.f32 %v235, 1.442695
    %v238 = vpow.pop %v237
    %v239 = vmul.f32 %v236, 1.442695
    %v240 = vpow.pop %v239
    %v241 = vmul.f32 %v231, %v238
    %v242 = vmul.f32 %v232, %v240
    %v243 = vsub.f32 1.0, %v241
    %v244 = vsub.f32 1.0, %v242
    %vm245 = vcmp.ge.f32.partialorder %v177, 0.0
    %vm246 = vcmp.ge.f32.partialorder %v178, 0.0
    %v247 = vsub.f32 0.0, %v243
    %v248 = vsub.f32 0.0, %v244
    %v249 = vsel %vm245, %v243, %v247
    %v250 = vsel %vm246, %v244, %v248
    %v251 = vadd.f32 %v249, 1.0
    %v252 = vadd.f32 %v250, 1.0
    %v253 = vmul.f32 %v175, %v251
    %v254 = vmul.f32 %v176, %v252
    %255 = vst [vmem:[%s5] sm:$0xff] %v253
    %256 = vst [vmem:[%s5 + $0x8] sm:$0xff] %v254
  $region29: #{custom_transformer_forward.13} parent=0 // pred_fallthru
    _
  // Predicated region
  $region30: #{custom_transformer_forward.13} parent=0 // pred_check
    _
  $region31: #{custom_transformer_forward.13} parent=0 // pred_check_branch
    %258 = sbr.rel (0) target = $region33
  $region32: #{custom_transformer_forward.13} parent=0 // pred_region
    _
  $region33: #{custom_transformer_forward.13} parent=0 // pred_fallthru
    _
  // Predicated region
  $region34: #{custom_transformer_forward.13} parent=0 // pred_check
    _
  $region35: #{custom_transformer_forward.13} parent=0 // pred_check_branch
    %260 = sbr.rel (0) target = $region37
  $region36: #{custom_transformer_forward.13} parent=0 // pred_region
    _
  $region37: #{custom_transformer_forward.13} parent=0 // pred_fallthru
    _

// kernel: custom_transformer_forward.14
$region0: #{custom_transformer_forward.14}
  #allocation0 [shape = 'u32[]', space=smem, size = 0x4, offset = 0x4, fixed_abs, tag = 'smem constant byte address 0x4 - core index']
  #allocation1 [shape = 'u32[72,128]{1,0:T(1,128)}', space=vmem, size = 0x9000, scoped, tag = 'internal scratch']
  #allocation2 [shape = 'f32[16,32]{1,0:T(8,128)}', space=vmem, size = 0x2000, scoped, tag = 'scratch operand']
  %s0 = inlined_call_operand.vmem [shape: f32[16,128], index: 0, kind: input, shape index: {}]
  %s1 = inlined_call_operand.vmem [shape: f32[32,128], index: 1, kind: input, shape index: {}]
  %s2 = inlined_call_operand.vmem [shape: f32[1,32], index: 2, kind: input, shape index: {}]
  %s3 = inlined_call_operand.vmem [shape: f32[16,32], index: 3, kind: input, shape index: {}]
  %s4 = inlined_call_operand.vmem [shape: f32[16,32], index: 4, kind: output, shape index: {}]
  %s5 = sld [smem:[#allocation0]]
  $region34: #{custom_transformer_forward.14} parent=0
    _
  %s7 = ssub.s32 1, %s5
  %s8 = scalar_select 0, %s7, %s5
  // Predicated region
  $region2: #{custom_transformer_forward.14} parent=0 // pred_check
    _
  $region3: #{custom_transformer_forward.14} parent=0 // pred_check_branch
    %10 = sbr.rel (0) target = $region5
  $region4: #{custom_transformer_forward.14} parent=0 // pred_region
    _
  $region5: #{custom_transformer_forward.14} parent=0 // pred_fallthru
    _
  // Predicated region
  $region6: #{custom_transformer_forward.14} parent=0 // pred_check
    _
  $region7: #{custom_transformer_forward.14} parent=0 // pred_check_branch
    %12 = sbr.rel (0) target = $region9
  $region8: #{custom_transformer_forward.14} parent=0 // pred_region
    _
  $region9: #{custom_transformer_forward.14} parent=0 // pred_fallthru
    _
  // Predicated region
  $region10: #{custom_transformer_forward.14} parent=0 // pred_check
    _
  $region11: #{custom_transformer_forward.14} parent=0 // pred_check_branch
    %14 = sbr.rel (0) target = $region13
  $region12: #{custom_transformer_forward.14} parent=0 // pred_region
    _
  $region13: #{custom_transformer_forward.14} parent=0 // pred_fallthru
    _
  // Predicated region
  $region14: #{custom_transformer_forward.14} parent=0 // pred_check
    _
  $region15: #{custom_transformer_forward.14} parent=0 // pred_check_branch
    %16 = sbr.rel (0) target = $region17
  $region16: #{custom_transformer_forward.14} parent=0 // pred_region
    _
  $region17: #{custom_transformer_forward.14} parent=0 // pred_fallthru
    _
  %p18 = scmp.eq.s32.totalorder 0, 0
  // Predicated region
  $region18: #{custom_transformer_forward.14} parent=0 // pred_check
    %p19 = pneg %p18
  $region19: #{custom_transformer_forward.14} parent=0 // pred_check_branch
    %21 = sbr.rel (%p19) target = $region21
  $region20: #{custom_transformer_forward.14} parent=0 // pred_region
    %vm22 = vcmask 261120
    %23 = vst.msk [vmem:[#allocation2] sm:$0xff] %vm22, 0.0
    %24 = vst.msk [vmem:[#allocation2 + $0x8] sm:$0xff] %vm22, 0.0
  $region21: #{custom_transformer_forward.14} parent=0 // pred_fallthru
    _
  %v25 = vld [vmem:[%s0] sm:$0xff]
  %v26 = vld [vmem:[%s0 + $0x8] sm:$0xff]
  %v27 = vpack.c.bf16 %v26, %v25
  %v28 = vld [vmem:[%s1] sm:$0xff]
  %v29 = vld [vmem:[%s1 + $0x8] sm:$0xff]
  %v30 = vld [vmem:[%s1 + $0x10] sm:$0xff]
  %v31 = vld [vmem:[%s1 + $0x18] sm:$0xff]
  %v32 = vpack.c.bf16 %v29, %v28
  %v33 = vpack.c.bf16 %v31, %v30
  %v34 = vld [vmem:[#allocation2] sm:$0xff]
  %v35 = vld [vmem:[#allocation2 + $0x8] sm:$0xff]
  %36 = vmatpush.bf16.xpose.msra.mxu0 0
  %37 = vmatpush.bf16.xpose.msra.mxu0 0
  %38 = vmatpush.bf16.xpose.msra.mxu0 0
  %39 = vmatpush.bf16.xpose.msra.mxu0 0
  %40 = vmatpush.bf16.xpose.msra.mxu0 0
  %41 = vmatpush.bf16.xpose.msra.mxu0 0
  %42 = vmatpush.bf16.xpose.msra.mxu0 %v33
  %43 = vmatpush.bf16.xpose.msra.mxu0 %v32
  %44 = vmatmul.bf16.gmra.mxu0 %v27
  %v45 = vpop.f32.mrf.mxu0
  %v46 = vadd.f32 0.0, %v45
  %v47 = vpop.f32.mrf.mxu0
  %v48 = vadd.f32 0.0, %v47
  %49 = vdwg.mxu0
  %v50 = vadd.f32 %v34, %v46
  %v51 = vadd.f32 %v35, %v48
  %vm52 = vcmask 261120
  %53 = vst.msk [vmem:[#allocation2] sm:$0xff] %vm52, %v50
  %54 = vst.msk [vmem:[#allocation2 + $0x8] sm:$0xff] %vm52, %v51
  // Predicated region
  $region22: #{custom_transformer_forward.14} parent=0 // pred_check
    %p55 = pneg %p18
  $region23: #{custom_transformer_forward.14} parent=0 // pred_check_branch
    %57 = sbr.rel (%p55) target = $region25
  $region24: #{custom_transformer_forward.14} parent=0 // pred_region
    %v58 = vld [vmem:[#allocation2] sm:$0xff]
    %v59 = vld [vmem:[#allocation2 + $0x8] sm:$0xff]
    %v60 = vld [vmem:[%s2] sm:$0x1]
    %v62 = vperm.slane %v60, 0
    %v64 = vadd.f32 %v58, %v62
    %v65 = vadd.f32 %v59, %v62
    %v66 = vld [vmem:[%s3] sm:$0xff]
    %v67 = vld [vmem:[%s3 + $0x8] sm:$0xff]
    %v68 = vadd.f32 %v64, %v66
    %v69 = vadd.f32 %v65, %v67
    %70 = vst.msk [vmem:[%s4] sm:$0xff] %vm52, %v68
    %71 = vst.msk [vmem:[%s4 + $0x8] sm:$0xff] %vm52, %v69
  $region25: #{custom_transformer_forward.14} parent=0 // pred_fallthru
    _
  // Predicated region
  $region26: #{custom_transformer_forward.14} parent=0 // pred_check
    _
  $region27: #{custom_transformer_forward.14} parent=0 // pred_check_branch
    %73 = sbr.rel (0) target = $region29
  $region28: #{custom_transformer_forward.14} parent=0 // pred_region
    _
  $region29: #{custom_transformer_forward.14} parent=0 // pred_fallthru
    _
  // Predicated region
  $region30: #{custom_transformer_forward.14} parent=0 // pred_check
    _
  $region31: #{custom_transformer_forward.14} parent=0 // pred_check_branch
    %75 = sbr.rel (0) target = $region33
  $region32: #{custom_transformer_forward.14} parent=0 // pred_region
    _
  $region33: #{custom_transformer_forward.14} parent=0 // pred_fallthru
    _

// kernel: custom_transformer_forward.19
$region0: #{custom_transformer_forward.19}
  #allocation0 [shape = 'u32[]', space=smem, size = 0x4, offset = 0x4, fixed_abs, tag = 'smem constant byte address 0x4 - core index']
  #allocation1 [shape = 'u32[72,128]{1,0:T(1,128)}', space=vmem, size = 0x9000, scoped, tag = 'internal scratch']
  #allocation2 [shape = 'f32[16,32]{1,0:T(8,128)}', space=vmem, size = 0x2000, scoped, tag = 'scratch operand']
  %s0 = inlined_call_operand.vmem [shape: f32[16,128], index: 0, kind: input, shape index: {}]
  %s1 = inlined_call_operand.vmem [shape: f32[32,128], index: 1, kind: input, shape index: {}]
  %s2 = inlined_call_operand.vmem [shape: f32[1,32], index: 2, kind: input, shape index: {}]
  %s3 = inlined_call_operand.vmem [shape: f32[16,32], index: 3, kind: input, shape index: {}]
  %s4 = inlined_call_operand.hbm [shape: f32[16,32], index: 4, kind: output, shape index: {}]
  %s5 = sld [smem:[#allocation0]]
  $region34: #{custom_transformer_forward.19} parent=0
    _
  %s7 = ssub.s32 1, %s5
  %s8 = scalar_select 0, %s7, %s5
  $region1: #{custom_transformer_forward.19} parent=0
    #allocation3 [shape = 'u8[8192]{0}', space=vmem, size = 0x2000, scoped, tag = 'output window, operand 0, single buffered']
    #allocation4 [shape = 's32[1]{0}', space=sflag, size = 0x4, scoped, tag = 'scoped memory for custom_transformer_forward.19']
    %9 = vsyncpa [#allocation4], 0
    // Predicated region
    $region2: #{custom_transformer_forward.19} parent=1 // pred_check
      _
    $region3: #{custom_transformer_forward.19} parent=1 // pred_check_branch
      %11 = sbr.rel (0) target = $region5
    $region4: #{custom_transformer_forward.19} parent=1 // pred_region
      _
    $region5: #{custom_transformer_forward.19} parent=1 // pred_fallthru
      _
    // Predicated region
    $region6: #{custom_transformer_forward.19} parent=1 // pred_check
      _
    $region7: #{custom_transformer_forward.19} parent=1 // pred_check_branch
      %13 = sbr.rel (0) target = $region9
    $region8: #{custom_transformer_forward.19} parent=1 // pred_region
      _
    $region9: #{custom_transformer_forward.19} parent=1 // pred_fallthru
      _
    // Predicated region
    $region10: #{custom_transformer_forward.19} parent=1 // pred_check
      _
    $region11: #{custom_transformer_forward.19} parent=1 // pred_check_branch
      %15 = sbr.rel (0) target = $region13
    $region12: #{custom_transformer_forward.19} parent=1 // pred_region
      _
    $region13: #{custom_transformer_forward.19} parent=1 // pred_fallthru
      _
    // Predicated region
    $region14: #{custom_transformer_forward.19} parent=1 // pred_check
      _
    $region15: #{custom_transformer_forward.19} parent=1 // pred_check_branch
      %17 = sbr.rel (0) target = $region17
    $region16: #{custom_transformer_forward.19} parent=1 // pred_region
      _
    $region17: #{custom_transformer_forward.19} parent=1 // pred_fallthru
      _
    %p19 = scmp.eq.s32.totalorder 0, 0
    // Predicated region
    $region18: #{custom_transformer_forward.19} parent=1 // pred_check
      %p20 = pneg %p19
    $region19: #{custom_transformer_forward.19} parent=1 // pred_check_branch
      %22 = sbr.rel (%p20) target = $region21
    $region20: #{custom_transformer_forward.19} parent=1 // pred_region
      %vm23 = vcmask 261120
      %24 = vst.msk [vmem:[#allocation2] sm:$0xff] %vm23, 0.0
      %25 = vst.msk [vmem:[#allocation2 + $0x8] sm:$0xff] %vm23, 0.0
    $region21: #{custom_transformer_forward.19} parent=1 // pred_fallthru
      _
    %v26 = vld [vmem:[%s0] sm:$0xff]
    %v27 = vld [vmem:[%s0 + $0x8] sm:$0xff]
    %v28 = vpack.c.bf16 %v27, %v26
    %v29 = vld [vmem:[%s1] sm:$0xff]
    %v30 = vld [vmem:[%s1 + $0x8] sm:$0xff]
    %v31 = vld [vmem:[%s1 + $0x10] sm:$0xff]
    %v32 = vld [vmem:[%s1 + $0x18] sm:$0xff]
    %v33 = vpack.c.bf16 %v30, %v29
    %v34 = vpack.c.bf16 %v32, %v31
    %v35 = vld [vmem:[#allocation2] sm:$0xff]
    %v36 = vld [vmem:[#allocation2 + $0x8] sm:$0xff]
    %37 = vmatpush.bf16.xpose.msra.mxu0 0
    %38 = vmatpush.bf16.xpose.msra.mxu0 0
    %39 = vmatpush.bf16.xpose.msra.mxu0 0
    %40 = vmatpush.bf16.xpose.msra.mxu0 0
    %41 = vmatpush.bf16.xpose.msra.mxu0 0
    %42 = vmatpush.bf16.xpose.msra.mxu0 0
    %43 = vmatpush.bf16.xpose.msra.mxu0 %v34
    %44 = vmatpush.bf16.xpose.msra.mxu0 %v33
    %45 = vmatmul.bf16.gmra.mxu0 %v28
    %v46 = vpop.f32.mrf.mxu0
    %v47 = vadd.f32 0.0, %v46
    %v48 = vpop.f32.mrf.mxu0
    %v49 = vadd.f32 0.0, %v48
    %50 = vdwg.mxu0
    %v51 = vadd.f32 %v35, %v47
    %v52 = vadd.f32 %v36, %v49
    %vm53 = vcmask 261120
    %54 = vst.msk [vmem:[#allocation2] sm:$0xff] %vm53, %v51
    %55 = vst.msk [vmem:[#allocation2 + $0x8] sm:$0xff] %vm53, %v52
    // Predicated region
    $region22: #{custom_transformer_forward.19} parent=1 // pred_check
      %p56 = pneg %p19
    $region23: #{custom_transformer_forward.19} parent=1 // pred_check_branch
      %58 = sbr.rel (%p56) target = $region25
    $region24: #{custom_transformer_forward.19} parent=1 // pred_region
      %v59 = vld [vmem:[#allocation2] sm:$0xff]
      %v60 = vld [vmem:[#allocation2 + $0x8] sm:$0xff]
      %v61 = vld [vmem:[%s2] sm:$0x1]
      %v63 = vperm.slane %v61, 0
      %v65 = vadd.f32 %v59, %v63
      %v66 = vadd.f32 %v60, %v63
      %v67 = vld [vmem:[%s3] sm:$0xff]
      %v68 = vld [vmem:[%s3 + $0x8] sm:$0xff]
      %v69 = vadd.f32 %v65, %v67
      %v70 = vadd.f32 %v66, %v68
      %71 = vst.msk [vmem:[#allocation3] sm:$0xff] %vm53, %v69
      %72 = vst.msk [vmem:[#allocation3 + $0x8] sm:$0xff] %vm53, %v70
    $region25: #{custom_transformer_forward.19} parent=1 // pred_fallthru
      _
    // Predicated region
    $region26: #{custom_transformer_forward.19} parent=1 // pred_check
      _
    $region27: #{custom_transformer_forward.19} parent=1 // pred_check_branch
      %74 = sbr.rel (0) target = $region29
    $region28: #{custom_transformer_forward.19} parent=1 // pred_region
      %76 = vsyncadd [#allocation4], 0
      %s77 = sshll.u32 [#allocation3], 4
      %s78 = int_to_ptr.vmem [resolvable:$true] %s77
      %s79 = sshll.u32 %s4, 4
      %s80 = int_to_ptr.hbm [resolvable:$true] %s79
      %85 = dma.vmem_to_hbm [thread:$0]  %s78, 256, %s80, [#allocation4], 128, 128, 8
    $region29: #{custom_transformer_forward.19} parent=1 // pred_fallthru
      _
    // Predicated region
    $region30: #{custom_transformer_forward.19} parent=1 // pred_check
      _
    $region31: #{custom_transformer_forward.19} parent=1 // pred_check_branch
      %87 = sbr.rel (0) target = $region33
    $region32: #{custom_transformer_forward.19} parent=1 // pred_region
      %89 = dma.done [#allocation4], 256
    $region33: #{custom_transformer_forward.19} parent=1 // pred_fallthru
      _
    %90 = vsyncpa [#allocation4], 1

</llo_original>
